<compile_context>
chip_gen: v7x
topology: tpu7x:2x2x1
jax: 0.10.0
libtpu: 0.0.40
codegen_flags: <defaults>
</compile_context>

<pallas_src>
import functools

import jax
import jax.numpy as jnp
from jax.experimental import pallas as pl
from jax.experimental.pallas import tpu as pltpu


def _round_up(x, m):
    return (x + m - 1) // m * m


def _slab_layout(obs_dim, hidden_dim, num_roles, num_players, action_dim):
    """Row layout of the single fused parameter slab (all sections lane-0 aligned)."""
    H = hidden_dim
    H2, H4 = H // 2, H // 4
    A1 = action_dim + 1
    obs_pad = _round_up(obs_dim, 8)
    rp_pad = _round_up(num_roles + num_players, 8)

    rows = (
        ("w1", obs_pad),      # [obs_pad, H]
        ("w2", H),            # [H, H]
        ("rp_tab", rp_pad),   # [rp_pad, 2*H4]  block-diag [role | player] table
        ("w_ih", H),          # [H, 4*H2]       g columns pre-scaled by 2
        ("w_hh", H2),         # [H2, 4*H2]      g columns pre-scaled by 2
        ("wh1_x", H),         # [H, 2*H]        fused policy|value head, layer 1
        ("wh1_rp", 2 * H4),   # [2*H4, 2*H]
        ("wh1_h", H2),        # [H2, 2*H]
        ("wh2", 2 * H),       # [2*H, A+1]      block-diag -> [logits | value]
        ("bias", 8),          # rows: b1, b2, b_lstm (g scaled), bh1, bh2
    )
    offs = {}
    r = 0
    for name, nrows in rows:
        offs[name] = (r, nrows)
        r += nrows
    total_rows = _round_up(r, 8)
    slab_cols = _round_up(max(H, 4 * H2, 2 * H, 2 * H4, A1), 128)
    return offs, total_rows, slab_cols, obs_pad, rp_pad


def werewolf_kernel(slab_ref, feat_ref, rp_oh_ref, hist_ref, h0_ref, c0_ref, out_ref,
                    *, offs, H, A1, T, sec):
    f32 = jnp.float32
    H2, H4 = H // 2, H // 4
    G = 4 * H2                       # packed gate width, PyTorch order i|f|g|o
    B = feat_ref.shape[0]

    def blk(name, cols):
        r0, nrows = offs[name]
        return slab_ref[r0:r0 + nrows, 0:cols]   # static view -> free address offset

    b_r0, _ = offs["bias"]
    biases = slab_ref[b_r0:b_r0 + 8, :]          # one aligned 8x128 load
    b1 = biases[0:1, 0:H]
    b2 = biases[1:2, 0:H]
    b_lstm = biases[2:3, 0:G]
    bh1 = biases[3:4, 0:2 * H]
    bh2 = biases[4:5, 0:A1]

    # --- feature extractor: Linear + ReLU + Linear + ReLU ---------------------
    x = jnp.dot(feat_ref[...], blk("w1", H), preferred_element_type=f32) + b1
    x = jnp.maximum(x, 0.0)
    x = jnp.dot(x, blk("w2", H), preferred_element_type=f32) + b2
    x = jnp.maximum(x, 0.0)

    # --- [role_emb | player_emb] via one block-diagonal matmul ----------------
    rp_emb = jnp.dot(rp_oh_ref[...], blk("rp_tab", 2 * H4), preferred_element_type=f32)

    # --- LSTM input projection hoisted out of the recurrence ------------------
    # hist is time-major flattened: rows t*B .. t*B+B-1 are timestep t.
    gates_x = (jnp.dot(hist_ref[...], blk("w_ih", G), preferred_element_type=f32)
               + b_lstm)                                            # [T*B, G]

    # g-gate fixup constants (hoisted): tanh(z) = 2*sigmoid(2z) - 1, with the *2 on z
    # folded into the g columns of w_ih / w_hh / b_lstm at param-prep time.
    lane = jax.lax.broadcasted_iota(jnp.int32, (B, G), 1)
    is_g = jnp.logical_and(lane >= 2 * H2, lane < 3 * H2)
    gmul = jnp.where(is_g, 2.0, 1.0).astype(f32)
    gadd = jnp.where(is_g, -1.0, 0.0).astype(f32)

    w_hh = blk("w_hh", G)

    # --- recurrence: fully unrolled; one MXU push + one EUP pass per step -----
    h = h0_ref[...]
    c = c0_ref[...]
    for t in range(T):
        r0 = t * B
        gts = gates_x[r0:r0 + B, :] + jnp.dot(h, w_hh, preferred_element_type=f32)
        s = jax.nn.sigmoid(gts)              # single EUP pass over the packed gates
        act = s * gmul + gadd                # VPU fixup: g lanes -> tanh
        i_g = act[:, 0 * H2:1 * H2]          # lane slices -> XLU, overlaps with MXU/EUP
        f_g = act[:, 1 * H2:2 * H2]
        g_g = act[:, 2 * H2:3 * H2]
        o_g = act[:, 3 * H2:4 * H2]
        c = f_g * c + i_g * g_g
        h = o_g * jnp.tanh(c)

    # --- fused policy/value heads (concat-free) --------------------------------
    hid = (jnp.dot(x, blk("wh1_x", 2 * H), preferred_element_type=f32)
           + jnp.dot(rp_emb, blk("wh1_rp", 2 * H), preferred_element_type=f32)
           + jnp.dot(h, blk("wh1_h", 2 * H), preferred_element_type=f32)
           + bh1)
    hid = jnp.maximum(hid, 0.0)
    head = jnp.dot(hid, blk("wh2", A1), preferred_element_type=f32) + bh2    # [B, A+1]

    # --- lane-aligned packed output: each section starts at lane 0 of a tile ---
    out_ref[:, 0:A1] = head
    out_ref[:, sec:sec + H2] = h
    out_ref[:, 2 * sec:2 * sec + H2] = c


def init_params(key, obs_dim, action_dim, num_players, num_roles, hidden_dim):
    """Raw (PyTorch-layout-transposed) parameters."""
    H, H4, H2 = hidden_dim, hidden_dim // 4, hidden_dim // 2
    combined_dim = H + 2 * H4
    total_dim = combined_dim + H2
    keys = jax.random.split(key, 20)

    def lin(k, din, dout, scale=0.1):
        return scale * jax.random.normal(k, (din, dout), jnp.float32)

    p = {
        "w1": lin(keys[0], obs_dim, H), "b1": jnp.zeros((1, H), jnp.float32),
        "w2": lin(keys[1], H, H),       "b2": jnp.zeros((1, H), jnp.float32),
        "role_tab":   0.1 * jax.random.normal(keys[2], (num_roles, H4), jnp.float32),
        "player_tab": 0.1 * jax.random.normal(keys[3], (num_players, H4), jnp.float32),
        # LSTM: input_size = H, hidden = H2, gate order i,f,g,o.  When importing real
        # PyTorch weights, b_lstm must be b_ih + b_hh.
        "w_ih": lin(keys[4], H, 4 * H2),
        "w_hh": lin(keys[5], H2, 4 * H2),
        "b_lstm": 0.1 * jax.random.normal(keys[6], (1, 4 * H2), jnp.float32),
        "wp1": lin(keys[7], total_dim, H), "bp1": jnp.zeros((1, H), jnp.float32),
        "wp2": lin(keys[8], H, action_dim), "bp2": jnp.zeros((1, action_dim), jnp.float32),
        "wv1": lin(keys[9], total_dim, H), "bv1": jnp.zeros((1, H), jnp.float32),
        "wv2": lin(keys[10], H, 1),        "bv2": jnp.zeros((1, 1), jnp.float32),
    }
    return p


def prepare_fused_params(params, obs_dim, action_dim, num_roles, num_players, hidden_dim):
    """One-time fusion of all weight/bias arrays into a single lane-aligned f32 slab."""
    H = hidden_dim
    H2, H4 = H // 2, H // 4
    A = action_dim
    A1 = A + 1
    offs, total_rows, slab_cols, obs_pad, rp_pad = _slab_layout(
        obs_dim, H, num_roles, num_players, A)
    del obs_pad, rp_pad  # padding handled by zero rows in the slab / wrapper

    # Pre-scale the g-gate (gate order i,f,g,o) columns by 2 so the kernel can use
    # tanh(z) = 2*sigmoid(2z) - 1 with a single sigmoid pass over the packed gates.
    def scale_g(w):
        return w.at[..., 2 * H2:3 * H2].multiply(2.0)

    w_ih = scale_g(params["w_ih"])
    w_hh = scale_g(params["w_hh"])
    b_lstm = scale_g(params["b_lstm"])

    # Block-diagonal embedding table: [role_oh | player_oh] @ rp_tab = [role_emb | player_emb].
    rp_tab = jnp.zeros((num_roles + num_players, 2 * H4), jnp.float32)
    rp_tab = rp_tab.at[:num_roles, :H4].set(params["role_tab"])
    rp_tab = rp_tab.at[num_roles:, H4:].set(params["player_tab"])

    # Fused head layer 1: columns = [policy_hidden | value_hidden], rows split per feature group.
    wh1 = jnp.concatenate([params["wp1"], params["wv1"]], axis=1)        # [total_dim, 2H]
    bh1 = jnp.concatenate([params["bp1"], params["bv1"]], axis=1)        # [1, 2H]
    wh1_x, wh1_rp, wh1_h = wh1[:H], wh1[H:H + 2 * H4], wh1[H + 2 * H4:]

    # Fused head layer 2: block-diagonal -> [logits | value].
    wh2 = jnp.zeros((2 * H, A1), jnp.float32)
    wh2 = wh2.at[:H, :A].set(params["wp2"])
    wh2 = wh2.at[H:, A:].set(params["wv2"])
    bh2 = jnp.concatenate([params["bp2"], params["bv2"]], axis=1)        # [1, A+1]

    sections = {
        "w1": params["w1"], "w2": params["w2"], "rp_tab": rp_tab,
        "w_ih": w_ih, "w_hh": w_hh,
        "wh1_x": wh1_x, "wh1_rp": wh1_rp, "wh1_h": wh1_h, "wh2": wh2,
    }
    slab = jnp.zeros((total_rows, slab_cols), jnp.float32)
    for name, mat in sections.items():
        r0, _ = offs[name]
        slab = slab.at[r0:r0 + mat.shape[0], :mat.shape[1]].set(mat.astype(jnp.float32))

    b_r0, _ = offs["bias"]
    for i, b in enumerate((params["b1"], params["b2"], b_lstm, bh1, bh2)):
        slab = slab.at[b_r0 + i:b_r0 + i + 1, :b.shape[1]].set(b.astype(jnp.float32))

    return slab


@functools.partial(jax.jit, static_argnames=("obs_dim", "action_dim", "num_roles",
                                              "num_players", "hidden_dim"))
def werewolf_forward(slab, features, role_id, player_id, history, hidden_state=None,
                     *, obs_dim, action_dim, num_roles, num_players, hidden_dim):
    """JAX wrapper mirroring WerewolfNetwork.forward (history provided)."""
    B = features.shape[0]
    H = hidden_dim
    H2 = H // 2
    A = action_dim
    A1 = A + 1
    T = history.shape[1]
    sec = _round_up(max(A1, H2), 128)

    offs, _, _, obs_pad, rp_pad = _slab_layout(obs_dim, H, num_roles, num_players, A)

    feat = features.astype(jnp.float32)
    if obs_pad != obs_dim:
        feat = jnp.pad(feat, ((0, 0), (0, obs_pad - obs_dim)))

    role_oh = jax.nn.one_hot(role_id, num_roles, dtype=jnp.float32)
    player_oh = jax.nn.one_hot(player_id, num_players, dtype=jnp.float32)
    rp_oh = jnp.concatenate([role_oh, player_oh], axis=-1)
    if rp_pad != num_roles + num_players:
        rp_oh = jnp.pad(rp_oh, ((0, 0), (0, rp_pad - (num_roles + num_players))))

    # TODO(synk): at production batch, store history time-major upstream (or fold the
    # transpose into a gridded BlockSpec index_map) instead of this per-call transpose.
    hist_flat = jnp.transpose(history.astype(jnp.float32), (1, 0, 2)).reshape(T * B, H)

    if hidden_state is None:
        h0 = jnp.zeros((B, H2), jnp.float32)
        c0 = jnp.zeros((B, H2), jnp.float32)
    else:
        h0 = hidden_state[0].reshape(B, H2).astype(jnp.float32)
        c0 = hidden_state[1].reshape(B, H2).astype(jnp.float32)

    kernel = functools.partial(werewolf_kernel, offs=offs, H=H, A1=A1, T=T, sec=sec)

    # Advisory cost estimate so XLA schedules the one-hot / transpose around this call.
    flops = 2 * (B * obs_pad * H + B * H * H + B * rp_pad * (H // 2)
                 + T * B * H * 4 * H2 + T * B * H2 * 4 * H2
                 + B * H * 2 * H + B * (H // 2) * 2 * H + B * H2 * 2 * H
                 + B * 2 * H * A1)
    transcendentals = 2 * T * B * 4 * H2
    bytes_accessed = 4 * (int(slab.size) + int(feat.size) + int(rp_oh.size)
                          + int(hist_flat.size) + int(h0.size) + int(c0.size)
                          + B * 3 * sec)

    vmem = pl.BlockSpec(memory_space=pltpu.MemorySpace.VMEM)
    # TODO(synk): for large B on v7x add a batch grid axis with
    # dimension_semantics=("parallel",) and a re-derived B_tile (64 MiB VMEM); on v6e
    # raise vmem_limit_bytes and take the largest B_tile that fits instead.
    out = pl.pallas_call(
        kernel,
        out_shape=jax.ShapeDtypeStruct((B, 3 * sec), jnp.float32),
        in_specs=[vmem] * 6,
        out_specs=vmem,
        cost_estimate=pl.CostEstimate(flops=flops,
                                      transcendentals=transcendentals,
                                      bytes_accessed=bytes_accessed),
    )(slab, feat, rp_oh, hist_flat, h0, c0)

    logits = out[:, 0:A]
    value = out[:, A:A1]
    h_new = out[:, sec:sec + H2]
    c_new = out[:, 2 * sec:2 * sec + H2]

    # PyTorch LSTM hidden state shape is (num_layers, B, H2).
    return logits, value, (h_new[None, :, :], c_new[None, :, :])


def reference_forward(params, features, role_id, player_id, history, hidden_state=None):
    """Pure-JAX reference replicating the PyTorch module semantics (raw params)."""
    B = features.shape[0]
    H = params["w1"].shape[1]
    H2 = H // 2

    x = jnp.maximum(features @ params["w1"] + params["b1"], 0.0)
    x = jnp.maximum(x @ params["w2"] + params["b2"], 0.0)
    role_emb = params["role_tab"][role_id]
    player_emb = params["player_tab"][player_id]
    combined = jnp.concatenate([x, role_emb, player_emb], axis=-1)

    if hidden_state is None:
        h = jnp.zeros((B, H2), jnp.float32)
        c = jnp.zeros((B, H2), jnp.float32)
    else:
        h, c = hidden_state
        h = h.reshape(B, H2)
        c = c.reshape(B, H2)

    T = history.shape[1]
    for t in range(T):
        x_t = history[:, t, :]
        gates = x_t @ params["w_ih"] + h @ params["w_hh"] + params["b_lstm"]
        i_g = jax.nn.sigmoid(gates[:, 0 * H2:1 * H2])
        f_g = jax.nn.sigmoid(gates[:, 1 * H2:2 * H2])
        g_g = jnp.tanh(gates[:, 2 * H2:3 * H2])
        o_g = jax.nn.sigmoid(gates[:, 3 * H2:4 * H2])
        c = f_g * c + i_g * g_g
        h = o_g * jnp.tanh(c)

    all_features = jnp.concatenate([combined, h], axis=-1)
    ph = jnp.maximum(all_features @ params["wp1"] + params["bp1"], 0.0)
    logits = ph @ params["wp2"] + params["bp2"]
    vh = jnp.maximum(all_features @ params["wv1"] + params["bv1"], 0.0)
    value = vh @ params["wv2"] + params["bv2"]
    return logits, value, (h[None], c[None])


if __name__ == "__main__":
    # Small shapes consistent with the module.
    B, OBS, A = 8, 32, 16
    NUM_PLAYERS, NUM_ROLES = 6, 6
    HIDDEN = 32
    T = 8  # history sequence length; LSTM input_size == HIDDEN

    key = jax.random.PRNGKey(0)
    k_par, k_feat, k_role, k_player, k_hist = jax.random.split(key, 5)

    params = init_params(k_par, OBS, A, NUM_PLAYERS, NUM_ROLES, HIDDEN)
    slab = prepare_fused_params(params, OBS, A, NUM_ROLES, NUM_PLAYERS, HIDDEN)

    features = jax.random.normal(k_feat, (B, OBS), jnp.float32)
    role_id = jax.random.randint(k_role, (B,), 0, NUM_ROLES)
    player_id = jax.random.randint(k_player, (B,), 0, NUM_PLAYERS)
    history = jax.random.normal(k_hist, (B, T, HIDDEN), jnp.float32)

    logits, value, (h_new, c_new) = werewolf_forward(
        slab, features, role_id, player_id, history, hidden_state=None,
        obs_dim=OBS, action_dim=A, num_roles=NUM_ROLES, num_players=NUM_PLAYERS,
        hidden_dim=HIDDEN)
    jax.block_until_ready((logits, value, h_new, c_new))

    # Correctness check against pure-JAX reference (raw, unfused params).
    r_logits, r_value, (r_h, r_c) = reference_forward(
        params, features, role_id, player_id, history, hidden_state=None)
    assert jnp.allclose(logits, r_logits, atol=2e-4, rtol=2e-4)
    assert jnp.allclose(value, r_value, atol=2e-4, rtol=2e-4)
    assert jnp.allclose(h_new, r_h, atol=2e-4, rtol=2e-4)
    assert jnp.allclose(c_new, r_c, atol=2e-4, rtol=2e-4)

    print("KERNEL_OK")
</pallas_src>

<mosaic_0001>
module attributes {stable_mosaic.version = 11 : i64} {
  func.func @werewolf_kernel(%arg0: memref<264x128xf32, #tpu.memory_space<vmem>>, %arg1: memref<8x32xf32, #tpu.memory_space<vmem>>, %arg2: memref<8x16xf32, #tpu.memory_space<vmem>>, %arg3: memref<64x32xf32, #tpu.memory_space<vmem>>, %arg4: memref<8x16xf32, #tpu.memory_space<vmem>>, %arg5: memref<8x16xf32, #tpu.memory_space<vmem>>, %arg6: memref<8x384xf32, #tpu.memory_space<vmem>>) attributes {dimension_semantics = [], scalar_prefetch = 0 : i64, scratch_operands = 0 : i64, tpu.core_type = #tpu.core_type<tc>} {
    %c256 = arith.constant 256 : index
    %c0 = arith.constant 0 : index
    %0 = vector.load %arg0[%c256, %c0] : memref<264x128xf32, #tpu.memory_space<vmem>>, vector<8x128xf32>
    %1 = vector.extract_strided_slice %0 {offsets = [0, 0], sizes = [1, 32], strides = [1, 1]} : vector<8x128xf32> to vector<1x32xf32>
    %2 = vector.extract_strided_slice %0 {offsets = [1, 0], sizes = [1, 32], strides = [1, 1]} : vector<8x128xf32> to vector<1x32xf32>
    %3 = vector.extract_strided_slice %0 {offsets = [2, 0], sizes = [1, 64], strides = [1, 1]} : vector<8x128xf32> to vector<1x64xf32>
    %4 = vector.extract_strided_slice %0 {offsets = [3, 0], sizes = [1, 64], strides = [1, 1]} : vector<8x128xf32> to vector<1x64xf32>
    %5 = vector.extract_strided_slice %0 {offsets = [4, 0], sizes = [1, 17], strides = [1, 1]} : vector<8x128xf32> to vector<1x17xf32>
    %c0_0 = arith.constant 0 : index
    %c0_1 = arith.constant 0 : index
    %6 = vector.load %arg1[%c0_0, %c0_1] : memref<8x32xf32, #tpu.memory_space<vmem>>, vector<8x32xf32>
    %c0_2 = arith.constant 0 : index
    %c0_3 = arith.constant 0 : index
    %7 = vector.load %arg0[%c0_2, %c0_3] : memref<264x128xf32, #tpu.memory_space<vmem>>, vector<32x32xf32>
    %cst = arith.constant dense<0.000000e+00> : vector<8x32xf32>
    %8 = tpu.matmul %6, %7, %cst {dimension_numbers = #tpu.dot_dimension_numbers<[1], [0], [0], [1], [0, 0, 1, 1], [], []>} : vector<8x32xf32>, vector<32x32xf32>, vector<8x32xf32> -> vector<8x32xf32>
    %9 = vector.broadcast %1 : vector<1x32xf32> to vector<8x32xf32>
    %10 = arith.addf %8, %9 : vector<8x32xf32>
    %cst_4 = arith.constant 0.000000e+00 : f32
    %11 = vector.broadcast %cst_4 : f32 to vector<8x32xf32>
    %12 = arith.maximumf %10, %11 : vector<8x32xf32>
    %c32 = arith.constant 32 : index
    %c0_5 = arith.constant 0 : index
    %13 = vector.load %arg0[%c32, %c0_5] : memref<264x128xf32, #tpu.memory_space<vmem>>, vector<32x32xf32>
    %cst_6 = arith.constant dense<0.000000e+00> : vector<8x32xf32>
    %14 = tpu.matmul %12, %13, %cst_6 {dimension_numbers = #tpu.dot_dimension_numbers<[1], [0], [0], [1], [0, 0, 1, 1], [], []>} : vector<8x32xf32>, vector<32x32xf32>, vector<8x32xf32> -> vector<8x32xf32>
    %15 = vector.broadcast %2 : vector<1x32xf32> to vector<8x32xf32>
    %16 = arith.addf %14, %15 : vector<8x32xf32>
    %cst_7 = arith.constant 0.000000e+00 : f32
    %17 = vector.broadcast %cst_7 : f32 to vector<8x32xf32>
    %18 = arith.maximumf %16, %17 : vector<8x32xf32>
    %c0_8 = arith.constant 0 : index
    %c0_9 = arith.constant 0 : index
    %19 = vector.load %arg2[%c0_8, %c0_9] : memref<8x16xf32, #tpu.memory_space<vmem>>, vector<8x16xf32>
    %c64 = arith.constant 64 : index
    %c0_10 = arith.constant 0 : index
    %20 = vector.load %arg0[%c64, %c0_10] : memref<264x128xf32, #tpu.memory_space<vmem>>, vector<16x16xf32>
    %cst_11 = arith.constant dense<0.000000e+00> : vector<8x16xf32>
    %21 = tpu.matmul %19, %20, %cst_11 {dimension_numbers = #tpu.dot_dimension_numbers<[1], [0], [0], [1], [0, 0, 1, 1], [], []>} : vector<8x16xf32>, vector<16x16xf32>, vector<8x16xf32> -> vector<8x16xf32>
    %c0_12 = arith.constant 0 : index
    %c0_13 = arith.constant 0 : index
    %22 = vector.load %arg3[%c0_12, %c0_13] : memref<64x32xf32, #tpu.memory_space<vmem>>, vector<64x32xf32>
    %c80 = arith.constant 80 : index
    %c0_14 = arith.constant 0 : index
    %23 = vector.load %arg0[%c80, %c0_14] : memref<264x128xf32, #tpu.memory_space<vmem>>, vector<32x64xf32>
    %cst_15 = arith.constant dense<0.000000e+00> : vector<64x64xf32>
    %24 = tpu.matmul %22, %23, %cst_15 {dimension_numbers = #tpu.dot_dimension_numbers<[1], [0], [0], [1], [0, 0, 1, 1], [], []>} : vector<64x32xf32>, vector<32x64xf32>, vector<64x64xf32> -> vector<64x64xf32>
    %25 = vector.broadcast %3 : vector<1x64xf32> to vector<64x64xf32>
    %26 = arith.addf %24, %25 : vector<64x64xf32>
    %27 = tpu.iota {dimensions = array<i32: 1>} : vector<8x64xi32>
    %c32_i32 = arith.constant 32 : i32
    %28 = vector.broadcast %c32_i32 : i32 to vector<8x64xi32>
    %29 = arith.cmpi sge, %27, %28 : vector<8x64xi32>
    %c48_i32 = arith.constant 48 : i32
    %30 = vector.broadcast %c48_i32 : i32 to vector<8x64xi32>
    %31 = arith.cmpi slt, %27, %30 : vector<8x64xi32>
    %32 = arith.andi %29, %31 : vector<8x64xi1>
    %cst_16 = arith.constant 2.000000e+00 : f32
    %cst_17 = arith.constant 1.000000e+00 : f32
    %33 = vector.broadcast %cst_16 : f32 to vector<8x64xf32>
    %34 = vector.broadcast %cst_17 : f32 to vector<8x64xf32>
    %35 = arith.select %32, %33, %34 : vector<8x64xi1>, vector<8x64xf32>
    %cst_18 = arith.constant -1.000000e+00 : f32
    %cst_19 = arith.constant 0.000000e+00 : f32
    %36 = vector.broadcast %cst_18 : f32 to vector<8x64xf32>
    %37 = vector.broadcast %cst_19 : f32 to vector<8x64xf32>
    %38 = arith.select %32, %36, %37 : vector<8x64xi1>, vector<8x64xf32>
    %c112 = arith.constant 112 : index
    %c0_20 = arith.constant 0 : index
    %39 = vector.load %arg0[%c112, %c0_20] : memref<264x128xf32, #tpu.memory_space<vmem>>, vector<16x64xf32>
    %c0_21 = arith.constant 0 : index
    %c0_22 = arith.constant 0 : index
    %40 = vector.load %arg4[%c0_21, %c0_22] : memref<8x16xf32, #tpu.memory_space<vmem>>, vector<8x16xf32>
    %c0_23 = arith.constant 0 : index
    %c0_24 = arith.constant 0 : index
    %41 = vector.load %arg5[%c0_23, %c0_24] : memref<8x16xf32, #tpu.memory_space<vmem>>, vector<8x16xf32>
    %42 = vector.extract_strided_slice %26 {offsets = [0, 0], sizes = [8, 64], strides = [1, 1]} : vector<64x64xf32> to vector<8x64xf32>
    %cst_25 = arith.constant dense<0.000000e+00> : vector<8x64xf32>
    %43 = tpu.matmul %40, %39, %cst_25 {dimension_numbers = #tpu.dot_dimension_numbers<[1], [0], [0], [1], [0, 0, 1, 1], [], []>} : vector<8x16xf32>, vector<16x64xf32>, vector<8x64xf32> -> vector<8x64xf32>
    %44 = arith.addf %42, %43 : vector<8x64xf32>
    %45 = arith.negf %44 : vector<8x64xf32>
    %46 = math.exp %45 : vector<8x64xf32>
    %cst_26 = arith.constant 1.000000e+00 : f32
    %47 = vector.broadcast %cst_26 : f32 to vector<8x64xf32>
    %48 = arith.addf %47, %46 : vector<8x64xf32>
    %49 = arith.divf %47, %48 : vector<8x64xf32>
    %50 = arith.mulf %49, %35 : vector<8x64xf32>
    %51 = arith.addf %50, %38 : vector<8x64xf32>
    %52 = vector.extract_strided_slice %51 {offsets = [0, 0], sizes = [8, 16], strides = [1, 1]} : vector<8x64xf32> to vector<8x16xf32>
    %53 = vector.extract_strided_slice %51 {offsets = [0, 16], sizes = [8, 16], strides = [1, 1]} : vector<8x64xf32> to vector<8x16xf32>
    %54 = vector.extract_strided_slice %51 {offsets = [0, 32], sizes = [8, 16], strides = [1, 1]} : vector<8x64xf32> to vector<8x16xf32>
    %55 = vector.extract_strided_slice %51 {offsets = [0, 48], sizes = [8, 16], strides = [1, 1]} : vector<8x64xf32> to vector<8x16xf32>
    %56 = arith.mulf %53, %41 : vector<8x16xf32>
    %57 = arith.mulf %52, %54 : vector<8x16xf32>
    %58 = arith.addf %56, %57 : vector<8x16xf32>
    %59 = math.tanh %58 : vector<8x16xf32>
    %60 = arith.mulf %55, %59 : vector<8x16xf32>
    %61 = vector.extract_strided_slice %26 {offsets = [8, 0], sizes = [8, 64], strides = [1, 1]} : vector<64x64xf32> to vector<8x64xf32>
    %cst_27 = arith.constant dense<0.000000e+00> : vector<8x64xf32>
    %62 = tpu.matmul %60, %39, %cst_27 {dimension_numbers = #tpu.dot_dimension_numbers<[1], [0], [0], [1], [0, 0, 1, 1], [], []>} : vector<8x16xf32>, vector<16x64xf32>, vector<8x64xf32> -> vector<8x64xf32>
    %63 = arith.addf %61, %62 : vector<8x64xf32>
    %64 = arith.negf %63 : vector<8x64xf32>
    %65 = math.exp %64 : vector<8x64xf32>
    %cst_28 = arith.constant 1.000000e+00 : f32
    %66 = vector.broadcast %cst_28 : f32 to vector<8x64xf32>
    %67 = arith.addf %66, %65 : vector<8x64xf32>
    %68 = arith.divf %66, %67 : vector<8x64xf32>
    %69 = arith.mulf %68, %35 : vector<8x64xf32>
    %70 = arith.addf %69, %38 : vector<8x64xf32>
    %71 = vector.extract_strided_slice %70 {offsets = [0, 0], sizes = [8, 16], strides = [1, 1]} : vector<8x64xf32> to vector<8x16xf32>
    %72 = vector.extract_strided_slice %70 {offsets = [0, 16], sizes = [8, 16], strides = [1, 1]} : vector<8x64xf32> to vector<8x16xf32>
    %73 = vector.extract_strided_slice %70 {offsets = [0, 32], sizes = [8, 16], strides = [1, 1]} : vector<8x64xf32> to vector<8x16xf32>
    %74 = vector.extract_strided_slice %70 {offsets = [0, 48], sizes = [8, 16], strides = [1, 1]} : vector<8x64xf32> to vector<8x16xf32>
    %75 = arith.mulf %72, %58 : vector<8x16xf32>
    %76 = arith.mulf %71, %73 : vector<8x16xf32>
    %77 = arith.addf %75, %76 : vector<8x16xf32>
    %78 = math.tanh %77 : vector<8x16xf32>
    %79 = arith.mulf %74, %78 : vector<8x16xf32>
    %80 = vector.extract_strided_slice %26 {offsets = [16, 0], sizes = [8, 64], strides = [1, 1]} : vector<64x64xf32> to vector<8x64xf32>
    %cst_29 = arith.constant dense<0.000000e+00> : vector<8x64xf32>
    %81 = tpu.matmul %79, %39, %cst_29 {dimension_numbers = #tpu.dot_dimension_numbers<[1], [0], [0], [1], [0, 0, 1, 1], [], []>} : vector<8x16xf32>, vector<16x64xf32>, vector<8x64xf32> -> vector<8x64xf32>
    %82 = arith.addf %80, %81 : vector<8x64xf32>
    %83 = arith.negf %82 : vector<8x64xf32>
    %84 = math.exp %83 : vector<8x64xf32>
    %cst_30 = arith.constant 1.000000e+00 : f32
    %85 = vector.broadcast %cst_30 : f32 to vector<8x64xf32>
    %86 = arith.addf %85, %84 : vector<8x64xf32>
    %87 = arith.divf %85, %86 : vector<8x64xf32>
    %88 = arith.mulf %87, %35 : vector<8x64xf32>
    %89 = arith.addf %88, %38 : vector<8x64xf32>
    %90 = vector.extract_strided_slice %89 {offsets = [0, 0], sizes = [8, 16], strides = [1, 1]} : vector<8x64xf32> to vector<8x16xf32>
    %91 = vector.extract_strided_slice %89 {offsets = [0, 16], sizes = [8, 16], strides = [1, 1]} : vector<8x64xf32> to vector<8x16xf32>
    %92 = vector.extract_strided_slice %89 {offsets = [0, 32], sizes = [8, 16], strides = [1, 1]} : vector<8x64xf32> to vector<8x16xf32>
    %93 = vector.extract_strided_slice %89 {offsets = [0, 48], sizes = [8, 16], strides = [1, 1]} : vector<8x64xf32> to vector<8x16xf32>
    %94 = arith.mulf %91, %77 : vector<8x16xf32>
    %95 = arith.mulf %90, %92 : vector<8x16xf32>
    %96 = arith.addf %94, %95 : vector<8x16xf32>
    %97 = math.tanh %96 : vector<8x16xf32>
    %98 = arith.mulf %93, %97 : vector<8x16xf32>
    %99 = vector.extract_strided_slice %26 {offsets = [24, 0], sizes = [8, 64], strides = [1, 1]} : vector<64x64xf32> to vector<8x64xf32>
    %cst_31 = arith.constant dense<0.000000e+00> : vector<8x64xf32>
    %100 = tpu.matmul %98, %39, %cst_31 {dimension_numbers = #tpu.dot_dimension_numbers<[1], [0], [0], [1], [0, 0, 1, 1], [], []>} : vector<8x16xf32>, vector<16x64xf32>, vector<8x64xf32> -> vector<8x64xf32>
    %101 = arith.addf %99, %100 : vector<8x64xf32>
    %102 = arith.negf %101 : vector<8x64xf32>
    %103 = math.exp %102 : vector<8x64xf32>
    %cst_32 = arith.constant 1.000000e+00 : f32
    %104 = vector.broadcast %cst_32 : f32 to vector<8x64xf32>
    %105 = arith.addf %104, %103 : vector<8x64xf32>
    %106 = arith.divf %104, %105 : vector<8x64xf32>
    %107 = arith.mulf %106, %35 : vector<8x64xf32>
    %108 = arith.addf %107, %38 : vector<8x64xf32>
    %109 = vector.extract_strided_slice %108 {offsets = [0, 0], sizes = [8, 16], strides = [1, 1]} : vector<8x64xf32> to vector<8x16xf32>
    %110 = vector.extract_strided_slice %108 {offsets = [0, 16], sizes = [8, 16], strides = [1, 1]} : vector<8x64xf32> to vector<8x16xf32>
    %111 = vector.extract_strided_slice %108 {offsets = [0, 32], sizes = [8, 16], strides = [1, 1]} : vector<8x64xf32> to vector<8x16xf32>
    %112 = vector.extract_strided_slice %108 {offsets = [0, 48], sizes = [8, 16], strides = [1, 1]} : vector<8x64xf32> to vector<8x16xf32>
    %113 = arith.mulf %110, %96 : vector<8x16xf32>
    %114 = arith.mulf %109, %111 : vector<8x16xf32>
    %115 = arith.addf %113, %114 : vector<8x16xf32>
    %116 = math.tanh %115 : vector<8x16xf32>
    %117 = arith.mulf %112, %116 : vector<8x16xf32>
    %118 = vector.extract_strided_slice %26 {offsets = [32, 0], sizes = [8, 64], strides = [1, 1]} : vector<64x64xf32> to vector<8x64xf32>
    %cst_33 = arith.constant dense<0.000000e+00> : vector<8x64xf32>
    %119 = tpu.matmul %117, %39, %cst_33 {dimension_numbers = #tpu.dot_dimension_numbers<[1], [0], [0], [1], [0, 0, 1, 1], [], []>} : vector<8x16xf32>, vector<16x64xf32>, vector<8x64xf32> -> vector<8x64xf32>
    %120 = arith.addf %118, %119 : vector<8x64xf32>
    %121 = arith.negf %120 : vector<8x64xf32>
    %122 = math.exp %121 : vector<8x64xf32>
    %cst_34 = arith.constant 1.000000e+00 : f32
    %123 = vector.broadcast %cst_34 : f32 to vector<8x64xf32>
    %124 = arith.addf %123, %122 : vector<8x64xf32>
    %125 = arith.divf %123, %124 : vector<8x64xf32>
    %126 = arith.mulf %125, %35 : vector<8x64xf32>
    %127 = arith.addf %126, %38 : vector<8x64xf32>
    %128 = vector.extract_strided_slice %127 {offsets = [0, 0], sizes = [8, 16], strides = [1, 1]} : vector<8x64xf32> to vector<8x16xf32>
    %129 = vector.extract_strided_slice %127 {offsets = [0, 16], sizes = [8, 16], strides = [1, 1]} : vector<8x64xf32> to vector<8x16xf32>
    %130 = vector.extract_strided_slice %127 {offsets = [0, 32], sizes = [8, 16], strides = [1, 1]} : vector<8x64xf32> to vector<8x16xf32>
    %131 = vector.extract_strided_slice %127 {offsets = [0, 48], sizes = [8, 16], strides = [1, 1]} : vector<8x64xf32> to vector<8x16xf32>
    %132 = arith.mulf %129, %115 : vector<8x16xf32>
    %133 = arith.mulf %128, %130 : vector<8x16xf32>
    %134 = arith.addf %132, %133 : vector<8x16xf32>
    %135 = math.tanh %134 : vector<8x16xf32>
    %136 = arith.mulf %131, %135 : vector<8x16xf32>
    %137 = vector.extract_strided_slice %26 {offsets = [40, 0], sizes = [8, 64], strides = [1, 1]} : vector<64x64xf32> to vector<8x64xf32>
    %cst_35 = arith.constant dense<0.000000e+00> : vector<8x64xf32>
    %138 = tpu.matmul %136, %39, %cst_35 {dimension_numbers = #tpu.dot_dimension_numbers<[1], [0], [0], [1], [0, 0, 1, 1], [], []>} : vector<8x16xf32>, vector<16x64xf32>, vector<8x64xf32> -> vector<8x64xf32>
    %139 = arith.addf %137, %138 : vector<8x64xf32>
    %140 = arith.negf %139 : vector<8x64xf32>
    %141 = math.exp %140 : vector<8x64xf32>
    %cst_36 = arith.constant 1.000000e+00 : f32
    %142 = vector.broadcast %cst_36 : f32 to vector<8x64xf32>
    %143 = arith.addf %142, %141 : vector<8x64xf32>
    %144 = arith.divf %142, %143 : vector<8x64xf32>
    %145 = arith.mulf %144, %35 : vector<8x64xf32>
    %146 = arith.addf %145, %38 : vector<8x64xf32>
    %147 = vector.extract_strided_slice %146 {offsets = [0, 0], sizes = [8, 16], strides = [1, 1]} : vector<8x64xf32> to vector<8x16xf32>
    %148 = vector.extract_strided_slice %146 {offsets = [0, 16], sizes = [8, 16], strides = [1, 1]} : vector<8x64xf32> to vector<8x16xf32>
    %149 = vector.extract_strided_slice %146 {offsets = [0, 32], sizes = [8, 16], strides = [1, 1]} : vector<8x64xf32> to vector<8x16xf32>
    %150 = vector.extract_strided_slice %146 {offsets = [0, 48], sizes = [8, 16], strides = [1, 1]} : vector<8x64xf32> to vector<8x16xf32>
    %151 = arith.mulf %148, %134 : vector<8x16xf32>
    %152 = arith.mulf %147, %149 : vector<8x16xf32>
    %153 = arith.addf %151, %152 : vector<8x16xf32>
    %154 = math.tanh %153 : vector<8x16xf32>
    %155 = arith.mulf %150, %154 : vector<8x16xf32>
    %156 = vector.extract_strided_slice %26 {offsets = [48, 0], sizes = [8, 64], strides = [1, 1]} : vector<64x64xf32> to vector<8x64xf32>
    %cst_37 = arith.constant dense<0.000000e+00> : vector<8x64xf32>
    %157 = tpu.matmul %155, %39, %cst_37 {dimension_numbers = #tpu.dot_dimension_numbers<[1], [0], [0], [1], [0, 0, 1, 1], [], []>} : vector<8x16xf32>, vector<16x64xf32>, vector<8x64xf32> -> vector<8x64xf32>
    %158 = arith.addf %156, %157 : vector<8x64xf32>
    %159 = arith.negf %158 : vector<8x64xf32>
    %160 = math.exp %159 : vector<8x64xf32>
    %cst_38 = arith.constant 1.000000e+00 : f32
    %161 = vector.broadcast %cst_38 : f32 to vector<8x64xf32>
    %162 = arith.addf %161, %160 : vector<8x64xf32>
    %163 = arith.divf %161, %162 : vector<8x64xf32>
    %164 = arith.mulf %163, %35 : vector<8x64xf32>
    %165 = arith.addf %164, %38 : vector<8x64xf32>
    %166 = vector.extract_strided_slice %165 {offsets = [0, 0], sizes = [8, 16], strides = [1, 1]} : vector<8x64xf32> to vector<8x16xf32>
    %167 = vector.extract_strided_slice %165 {offsets = [0, 16], sizes = [8, 16], strides = [1, 1]} : vector<8x64xf32> to vector<8x16xf32>
    %168 = vector.extract_strided_slice %165 {offsets = [0, 32], sizes = [8, 16], strides = [1, 1]} : vector<8x64xf32> to vector<8x16xf32>
    %169 = vector.extract_strided_slice %165 {offsets = [0, 48], sizes = [8, 16], strides = [1, 1]} : vector<8x64xf32> to vector<8x16xf32>
    %170 = arith.mulf %167, %153 : vector<8x16xf32>
    %171 = arith.mulf %166, %168 : vector<8x16xf32>
    %172 = arith.addf %170, %171 : vector<8x16xf32>
    %173 = math.tanh %172 : vector<8x16xf32>
    %174 = arith.mulf %169, %173 : vector<8x16xf32>
    %175 = vector.extract_strided_slice %26 {offsets = [56, 0], sizes = [8, 64], strides = [1, 1]} : vector<64x64xf32> to vector<8x64xf32>
    %cst_39 = arith.constant dense<0.000000e+00> : vector<8x64xf32>
    %176 = tpu.matmul %174, %39, %cst_39 {dimension_numbers = #tpu.dot_dimension_numbers<[1], [0], [0], [1], [0, 0, 1, 1], [], []>} : vector<8x16xf32>, vector<16x64xf32>, vector<8x64xf32> -> vector<8x64xf32>
    %177 = arith.addf %175, %176 : vector<8x64xf32>
    %178 = arith.negf %177 : vector<8x64xf32>
    %179 = math.exp %178 : vector<8x64xf32>
    %cst_40 = arith.constant 1.000000e+00 : f32
    %180 = vector.broadcast %cst_40 : f32 to vector<8x64xf32>
    %181 = arith.addf %180, %179 : vector<8x64xf32>
    %182 = arith.divf %180, %181 : vector<8x64xf32>
    %183 = arith.mulf %182, %35 : vector<8x64xf32>
    %184 = arith.addf %183, %38 : vector<8x64xf32>
    %185 = vector.extract_strided_slice %184 {offsets = [0, 0], sizes = [8, 16], strides = [1, 1]} : vector<8x64xf32> to vector<8x16xf32>
    %186 = vector.extract_strided_slice %184 {offsets = [0, 16], sizes = [8, 16], strides = [1, 1]} : vector<8x64xf32> to vector<8x16xf32>
    %187 = vector.extract_strided_slice %184 {offsets = [0, 32], sizes = [8, 16], strides = [1, 1]} : vector<8x64xf32> to vector<8x16xf32>
    %188 = vector.extract_strided_slice %184 {offsets = [0, 48], sizes = [8, 16], strides = [1, 1]} : vector<8x64xf32> to vector<8x16xf32>
    %189 = arith.mulf %186, %172 : vector<8x16xf32>
    %190 = arith.mulf %185, %187 : vector<8x16xf32>
    %191 = arith.addf %189, %190 : vector<8x16xf32>
    %192 = math.tanh %191 : vector<8x16xf32>
    %193 = arith.mulf %188, %192 : vector<8x16xf32>
    %c128 = arith.constant 128 : index
    %c0_41 = arith.constant 0 : index
    %194 = vector.load %arg0[%c128, %c0_41] : memref<264x128xf32, #tpu.memory_space<vmem>>, vector<32x64xf32>
    %cst_42 = arith.constant dense<0.000000e+00> : vector<8x64xf32>
    %195 = tpu.matmul %18, %194, %cst_42 {dimension_numbers = #tpu.dot_dimension_numbers<[1], [0], [0], [1], [0, 0, 1, 1], [], []>} : vector<8x32xf32>, vector<32x64xf32>, vector<8x64xf32> -> vector<8x64xf32>
    %c160 = arith.constant 160 : index
    %c0_43 = arith.constant 0 : index
    %196 = vector.load %arg0[%c160, %c0_43] : memref<264x128xf32, #tpu.memory_space<vmem>>, vector<16x64xf32>
    %cst_44 = arith.constant dense<0.000000e+00> : vector<8x64xf32>
    %197 = tpu.matmul %21, %196, %cst_44 {dimension_numbers = #tpu.dot_dimension_numbers<[1], [0], [0], [1], [0, 0, 1, 1], [], []>} : vector<8x16xf32>, vector<16x64xf32>, vector<8x64xf32> -> vector<8x64xf32>
    %198 = arith.addf %195, %197 : vector<8x64xf32>
    %c176 = arith.constant 176 : index
    %c0_45 = arith.constant 0 : index
    %199 = vector.load %arg0[%c176, %c0_45] : memref<264x128xf32, #tpu.memory_space<vmem>>, vector<16x64xf32>
    %cst_46 = arith.constant dense<0.000000e+00> : vector<8x64xf32>
    %200 = tpu.matmul %193, %199, %cst_46 {dimension_numbers = #tpu.dot_dimension_numbers<[1], [0], [0], [1], [0, 0, 1, 1], [], []>} : vector<8x16xf32>, vector<16x64xf32>, vector<8x64xf32> -> vector<8x64xf32>
    %201 = arith.addf %198, %200 : vector<8x64xf32>
    %202 = vector.broadcast %4 : vector<1x64xf32> to vector<8x64xf32>
    %203 = arith.addf %201, %202 : vector<8x64xf32>
    %cst_47 = arith.constant 0.000000e+00 : f32
    %204 = vector.broadcast %cst_47 : f32 to vector<8x64xf32>
    %205 = arith.maximumf %203, %204 : vector<8x64xf32>
    %c192 = arith.constant 192 : index
    %c0_48 = arith.constant 0 : index
    %206 = vector.load %arg0[%c192, %c0_48] : memref<264x128xf32, #tpu.memory_space<vmem>>, vector<64x17xf32>
    %cst_49 = arith.constant dense<0.000000e+00> : vector<8x17xf32>
    %207 = tpu.matmul %205, %206, %cst_49 {dimension_numbers = #tpu.dot_dimension_numbers<[1], [0], [0], [1], [0, 0, 1, 1], [], []>} : vector<8x64xf32>, vector<64x17xf32>, vector<8x17xf32> -> vector<8x17xf32>
    %208 = vector.broadcast %5 : vector<1x17xf32> to vector<8x17xf32>
    %209 = arith.addf %207, %208 : vector<8x17xf32>
    %c0_50 = arith.constant 0 : index
    %c0_51 = arith.constant 0 : index
    %210 = vector.load %arg6[%c0_50, %c0_51] : memref<8x384xf32, #tpu.memory_space<vmem>>, vector<8x17xf32>
    tpu.vector_store %arg6[%c0_50, %c0_51], %209 {strides = array<i32>} : memref<8x384xf32, #tpu.memory_space<vmem>>, vector<8x17xf32>,
    %c0_52 = arith.constant 0 : index
    %c128_53 = arith.constant 128 : index
    %211 = vector.load %arg6[%c0_52, %c128_53] : memref<8x384xf32, #tpu.memory_space<vmem>>, vector<8x16xf32>
    tpu.vector_store %arg6[%c0_52, %c128_53], %193 {strides = array<i32>} : memref<8x384xf32, #tpu.memory_space<vmem>>, vector<8x16xf32>,
    %c0_54 = arith.constant 0 : index
    %c256_55 = arith.constant 256 : index
    %212 = vector.load %arg6[%c0_54, %c256_55] : memref<8x384xf32, #tpu.memory_space<vmem>>, vector<8x16xf32>
    tpu.vector_store %arg6[%c0_54, %c256_55], %191 {strides = array<i32>} : memref<8x384xf32, #tpu.memory_space<vmem>>, vector<8x16xf32>,
    return
  }
}

</mosaic_0001>

<llo_original>
// kernel: werewolf_forward.1
$region0: #{werewolf_forward.1}
  #allocation0 [shape = 'u32[]', space=smem, size = 0x4, offset = 0x4, fixed_abs, tag = 'smem constant byte address 0x4 - core index']
  #allocation1 [shape = 'u32[144,128]{1,0:T(1,128)}', space=vmem, size = 0x12000, scoped, tag = 'internal scratch']
  %s0 = inlined_call_operand.hbm [shape: f32[264,128], index: 0, kind: input, shape index: {}]
  %s1 = inlined_call_operand.vmem [shape: f32[8,32], index: 1, kind: input, shape index: {}]
  %s2 = inlined_call_operand.vmem [shape: f32[8,16], index: 2, kind: input, shape index: {}]
  %s3 = inlined_call_operand.vmem [shape: f32[64,32], index: 3, kind: input, shape index: {}]
  %s4 = inlined_call_operand.vmem [shape: f32[8,16], index: 4, kind: input, shape index: {}, may-alias: {4,5}]
  %s5 = inlined_call_operand.vmem [shape: f32[8,16], index: 5, kind: input, shape index: {}, may-alias: {4,5}]
  %s6 = inlined_call_operand.vmem [shape: f32[8,384], index: 6, kind: output, shape index: {}]
  %s7 = sld [smem:[#allocation0]]
  $region38: #{werewolf_forward.1} parent=0
    _
  %s9 = ssub.s32 1, %s7
  %s10 = scalar_select 0, %s9, %s7
  $region1: #{werewolf_forward.1} parent=0
    #allocation2 [shape = 'u8[135168]{0}', space=vmem, size = 0x21000, scoped, tag = 'input window, operand 0, single buffered']
    #allocation3 [shape = 's32[1]{0}', space=sflag, size = 0x4, scoped, tag = 'scoped memory for werewolf_forward.1']
    %11 = vsyncpa [#allocation3], 0
    // Predicated region
    $region2: #{werewolf_forward.1} parent=1 // pred_check
      _
    $region3: #{werewolf_forward.1} parent=1 // pred_check_branch
      %13 = sbr.rel (0) target = $region5
    $region4: #{werewolf_forward.1} parent=1 // pred_region
      %s15 = ssub.s32 4224, 4224
      %16 = vsyncadd [#allocation3], %s15
      %s17 = sshll.u32 [#allocation2], 4
      %s18 = int_to_ptr.vmem [resolvable:$true] %s17
      %23 = dma.hbm_to_vmem [thread:$0]  %s0, 4224, %s18, [#allocation3], 128, 128, 8
    $region5: #{werewolf_forward.1} parent=1 // pred_fallthru
      _
    // Predicated region
    $region6: #{werewolf_forward.1} parent=1 // pred_check
      _
    $region7: #{werewolf_forward.1} parent=1 // pred_check_branch
      %25 = sbr.rel (0) target = $region9
    $region8: #{werewolf_forward.1} parent=1 // pred_region
      _
    $region9: #{werewolf_forward.1} parent=1 // pred_fallthru
      _
    // Predicated region
    $region10: #{werewolf_forward.1} parent=1 // pred_check
      _
    $region11: #{werewolf_forward.1} parent=1 // pred_check_branch
      %27 = sbr.rel (0) target = $region13
    $region12: #{werewolf_forward.1} parent=1 // pred_region
      _
    $region13: #{werewolf_forward.1} parent=1 // pred_fallthru
      _
    // Predicated region
    $region14: #{werewolf_forward.1} parent=1 // pred_check
      _
    $region15: #{werewolf_forward.1} parent=1 // pred_check_branch
      %29 = sbr.rel (0) target = $region17
    $region16: #{werewolf_forward.1} parent=1 // pred_region
      _
    $region17: #{werewolf_forward.1} parent=1 // pred_fallthru
      _
    // Predicated region
    $region18: #{werewolf_forward.1} parent=1 // pred_check
      _
    $region19: #{werewolf_forward.1} parent=1 // pred_check_branch
      %31 = sbr.rel (0) target = $region21
    $region20: #{werewolf_forward.1} parent=1 // pred_region
      _
    $region21: #{werewolf_forward.1} parent=1 // pred_fallthru
      _
    // Predicated region
    $region22: #{werewolf_forward.1} parent=1 // pred_check
      _
    $region23: #{werewolf_forward.1} parent=1 // pred_check_branch
      %33 = sbr.rel (0) target = $region25
    $region24: #{werewolf_forward.1} parent=1 // pred_region
      _
    $region25: #{werewolf_forward.1} parent=1 // pred_fallthru
      _
    // Predicated region
    $region26: #{werewolf_forward.1} parent=1 // pred_check
      _
    $region27: #{werewolf_forward.1} parent=1 // pred_check_branch
      %35 = sbr.rel (0) target = $region29
    $region28: #{werewolf_forward.1} parent=1 // pred_region
      %36 = dma.done [#allocation3], 4224
    $region29: #{werewolf_forward.1} parent=1 // pred_fallthru
      _
    %v37 = vld [vmem:[#allocation2 + $0x100] sm:$0xff]
    %v38 = vld [vmem:[%s1] sm:$0xff]
    %v39 = vld [vmem:[#allocation2] sm:$0xff]
    %v40 = vld [vmem:[#allocation2 + $0x8] sm:$0xff]
    %v41 = vld [vmem:[#allocation2 + $0x10] sm:$0xff]
    %v42 = vld [vmem:[#allocation2 + $0x18] sm:$0xff]
    %v43 = vlaneseq
    %v44 = vshrl.u32 %v43, 7
    %v45 = vsub.s32 0, %v44
    %v46 = vrot.slane %v37, %v45
    %vm47 = vcmask 261120
    %v49 = vsel %vm47, %v38, 0
    %51 = vmatprep.subr.mxu0 0.0
    %52 = vmatpush1.msra.mxu0 %v39
    %53 = vmatprep.subr.mxu0 0.0
    %54 = vmatpush1.msra.mxu0 %v40
    %55 = vmatprep.subr.mxu0 0.0
    %56 = vmatpush1.msra.mxu0 %v41
    %57 = vmatprep.subr.mxu0 0.0
    %58 = vmatpush1.msra.mxu0 %v42
    %59 = vmatprep.subr.mxu0 0.0
    %60 = vmatpush1.msra.mxu0 0.0
    %61 = vmatprep.subr.mxu0 0.0
    %62 = vmatpush1.msra.mxu0 0.0
    %63 = vmatprep.subr.mxu0 0.0
    %64 = vmatpush1.msra.mxu0 0.0
    %65 = vmatprep.subr.mxu0 0.0
    %66 = vmatpush1.msra.mxu0 0.0
    %67 = vmatprep.subr.mxu0 0.0
    %68 = vmatpush1.msra.mxu0 0.0
    %69 = vmatprep.subr.mxu0 0.0
    %70 = vmatpush1.msra.mxu0 0.0
    %71 = vmatprep.subr.mxu0 0.0
    %72 = vmatpush1.msra.mxu0 0.0
    %73 = vmatprep.subr.mxu0 0.0
    %74 = vmatpush1.msra.mxu0 0.0
    %75 = vmatprep.subr.mxu0 0.0
    %76 = vmatpush1.msra.mxu0 0.0
    %77 = vmatprep.subr.mxu0 0.0
    %78 = vmatpush1.msra.mxu0 0.0
    %79 = vmatprep.subr.mxu0 0.0
    %80 = vmatpush1.msra.mxu0 0.0
    %81 = vmatprep.subr.mxu0 0.0
    %82 = vmatpush1.msra.mxu0 0.0
    %83 = vmatprep.subr.mxu0 0.0
    %84 = vmatpush1.msra.mxu0 0.0
    %85 = vmatprep.subr.mxu0 0.0
    %86 = vmatpush1.msra.mxu0 0.0
    %87 = vmatprep.subr.mxu0 0.0
    %88 = vmatpush1.msra.mxu0 0.0
    %89 = vmatprep.subr.mxu0 0.0
    %90 = vmatpush1.msra.mxu0 0.0
    %91 = vmatprep.subr.mxu0 0.0
    %92 = vmatpush1.msra.mxu0 0.0
    %93 = vmatprep.subr.mxu0 0.0
    %94 = vmatpush1.msra.mxu0 0.0
    %95 = vmatprep.subr.mxu0 0.0
    %96 = vmatpush1.msra.mxu0 0.0
    %97 = vmatprep.subr.mxu0 0.0
    %98 = vmatpush1.msra.mxu0 0.0
    %99 = vmatprep.subr.mxu0 0.0
    %100 = vmatpush1.msra.mxu0 0.0
    %101 = vmatprep.subr.mxu0 0.0
    %102 = vmatpush1.msra.mxu0 0.0
    %103 = vmatprep.subr.mxu0 0.0
    %104 = vmatpush1.msra.mxu0 0.0
    %105 = vmatprep.subr.mxu0 0.0
    %106 = vmatpush1.msra.mxu0 0.0
    %107 = vmatprep.subr.mxu0 0.0
    %108 = vmatpush1.msra.mxu0 0.0
    %109 = vmatprep.subr.mxu0 0.0
    %110 = vmatpush1.msra.mxu0 0.0
    %111 = vmatprep.subr.mxu0 0.0
    %112 = vmatpush1.msra.mxu0 0.0
    %113 = vmatprep.subr.mxu0 0.0
    %114 = vmatpush1.msra.mxu0 0.0
    %115 = vmatprep.mubr.f32.mxu0 0.0
    %116 = vmatmul.mubr.f32.gmra.mrb[0].mxu0 %v49
    %v117 = vpop.f32.mrb[0].mxu0
    %v118 = vadd.f32 %v46, %v117
    %v119 = vpop.f32.mrb[0].mxu0
    %120 = vdwg.mxu0
    %v121 = vmax.f32 %v118, 0.0
    %v122 = vld [vmem:[#allocation2 + $0x20] sm:$0xff]
    %v123 = vld [vmem:[#allocation2 + $0x28] sm:$0xff]
    %v124 = vld [vmem:[#allocation2 + $0x30] sm:$0xff]
    %v125 = vld [vmem:[#allocation2 + $0x38] sm:$0xff]
    %v126 = vlaneseq
    %v127 = vshrl.u32 %v126, 7
    %v128 = vsub.s32 1, %v127
    %v129 = vrot.slane %v37, %v128
    %v131 = vsel %vm47, %v121, 0
    %133 = vmatprep.subr.mxu0 0.0
    %134 = vmatpush1.msra.mxu0 %v122
    %135 = vmatprep.subr.mxu0 0.0
    %136 = vmatpush1.msra.mxu0 %v123
    %137 = vmatprep.subr.mxu0 0.0
    %138 = vmatpush1.msra.mxu0 %v124
    %139 = vmatprep.subr.mxu0 0.0
    %140 = vmatpush1.msra.mxu0 %v125
    %141 = vmatprep.subr.mxu0 0.0
    %142 = vmatpush1.msra.mxu0 0.0
    %143 = vmatprep.subr.mxu0 0.0
    %144 = vmatpush1.msra.mxu0 0.0
    %145 = vmatprep.subr.mxu0 0.0
    %146 = vmatpush1.msra.mxu0 0.0
    %147 = vmatprep.subr.mxu0 0.0
    %148 = vmatpush1.msra.mxu0 0.0
    %149 = vmatprep.subr.mxu0 0.0
    %150 = vmatpush1.msra.mxu0 0.0
    %151 = vmatprep.subr.mxu0 0.0
    %152 = vmatpush1.msra.mxu0 0.0
    %153 = vmatprep.subr.mxu0 0.0
    %154 = vmatpush1.msra.mxu0 0.0
    %155 = vmatprep.subr.mxu0 0.0
    %156 = vmatpush1.msra.mxu0 0.0
    %157 = vmatprep.subr.mxu0 0.0
    %158 = vmatpush1.msra.mxu0 0.0
    %159 = vmatprep.subr.mxu0 0.0
    %160 = vmatpush1.msra.mxu0 0.0
    %161 = vmatprep.subr.mxu0 0.0
    %162 = vmatpush1.msra.mxu0 0.0
    %163 = vmatprep.subr.mxu0 0.0
    %164 = vmatpush1.msra.mxu0 0.0
    %165 = vmatprep.subr.mxu0 0.0
    %166 = vmatpush1.msra.mxu0 0.0
    %167 = vmatprep.subr.mxu0 0.0
    %168 = vmatpush1.msra.mxu0 0.0
    %169 = vmatprep.subr.mxu0 0.0
    %170 = vmatpush1.msra.mxu0 0.0
    %171 = vmatprep.subr.mxu0 0.0
    %172 = vmatpush1.msra.mxu0 0.0
    %173 = vmatprep.subr.mxu0 0.0
    %174 = vmatpush1.msra.mxu0 0.0
    %175 = vmatprep.subr.mxu0 0.0
    %176 = vmatpush1.msra.mxu0 0.0
    %177 = vmatprep.subr.mxu0 0.0
    %178 = vmatpush1.msra.mxu0 0.0
    %179 = vmatprep.subr.mxu0 0.0
    %180 = vmatpush1.msra.mxu0 0.0
    %181 = vmatprep.subr.mxu0 0.0
    %182 = vmatpush1.msra.mxu0 0.0
    %183 = vmatprep.subr.mxu0 0.0
    %184 = vmatpush1.msra.mxu0 0.0
    %185 = vmatprep.subr.mxu0 0.0
    %186 = vmatpush1.msra.mxu0 0.0
    %187 = vmatprep.subr.mxu0 0.0
    %188 = vmatpush1.msra.mxu0 0.0
    %189 = vmatprep.subr.mxu0 0.0
    %190 = vmatpush1.msra.mxu0 0.0
    %191 = vmatprep.subr.mxu0 0.0
    %192 = vmatpush1.msra.mxu0 0.0
    %193 = vmatprep.subr.mxu0 0.0
    %194 = vmatpush1.msra.mxu0 0.0
    %195 = vmatprep.subr.mxu0 0.0
    %196 = vmatpush1.msra.mxu0 0.0
    %197 = vmatprep.mubr.f32.mxu0 0.0
    %198 = vmatmul.mubr.f32.gmra.mrb[0].mxu0 %v131
    %v199 = vpop.f32.mrb[0].mxu0
    %v200 = vadd.f32 %v129, %v199
    %v201 = vpop.f32.mrb[0].mxu0
    %202 = vdwg.mxu0
    %v203 = vmax.f32 %v200, 0.0
    %v204 = vld [vmem:[%s2] sm:$0xff]
    %v205 = vld [vmem:[#allocation2 + $0x40] sm:$0xff]
    %v206 = vld [vmem:[#allocation2 + $0x48] sm:$0xff]
    %vm207 = vcmask 130048
    %v209 = vsel %vm207, %v204, 0
    %211 = vmatprep.subr.mxu0 0.0
    %212 = vmatpush1.msra.mxu0 %v205
    %213 = vmatprep.subr.mxu0 0.0
    %214 = vmatpush1.msra.mxu0 %v206
    %215 = vmatprep.subr.mxu0 0.0
    %216 = vmatpush1.msra.mxu0 0.0
    %217 = vmatprep.subr.mxu0 0.0
    %218 = vmatpush1.msra.mxu0 0.0
    %219 = vmatprep.subr.mxu0 0.0
    %220 = vmatpush1.msra.mxu0 0.0
    %221 = vmatprep.subr.mxu0 0.0
    %222 = vmatpush1.msra.mxu0 0.0
    %223 = vmatprep.subr.mxu0 0.0
    %224 = vmatpush1.msra.mxu0 0.0
    %225 = vmatprep.subr.mxu0 0.0
    %226 = vmatpush1.msra.mxu0 0.0
    %227 = vmatprep.subr.mxu0 0.0
    %228 = vmatpush1.msra.mxu0 0.0
    %229 = vmatprep.subr.mxu0 0.0
    %230 = vmatpush1.msra.mxu0 0.0
    %231 = vmatprep.subr.mxu0 0.0
    %232 = vmatpush1.msra.mxu0 0.0
    %233 = vmatprep.subr.mxu0 0.0
    %234 = vmatpush1.msra.mxu0 0.0
    %235 = vmatprep.subr.mxu0 0.0
    %236 = vmatpush1.msra.mxu0 0.0
    %237 = vmatprep.subr.mxu0 0.0
    %238 = vmatpush1.msra.mxu0 0.0
    %239 = vmatprep.subr.mxu0 0.0
    %240 = vmatpush1.msra.mxu0 0.0
    %241 = vmatprep.subr.mxu0 0.0
    %242 = vmatpush1.msra.mxu0 0.0
    %243 = vmatprep.subr.mxu0 0.0
    %244 = vmatpush1.msra.mxu0 0.0
    %245 = vmatprep.subr.mxu0 0.0
    %246 = vmatpush1.msra.mxu0 0.0
    %247 = vmatprep.subr.mxu0 0.0
    %248 = vmatpush1.msra.mxu0 0.0
    %249 = vmatprep.subr.mxu0 0.0
    %250 = vmatpush1.msra.mxu0 0.0
    %251 = vmatprep.subr.mxu0 0.0
    %252 = vmatpush1.msra.mxu0 0.0
    %253 = vmatprep.subr.mxu0 0.0
    %254 = vmatpush1.msra.mxu0 0.0
    %255 = vmatprep.subr.mxu0 0.0
    %256 = vmatpush1.msra.mxu0 0.0
    %257 = vmatprep.subr.mxu0 0.0
    %258 = vmatpush1.msra.mxu0 0.0
    %259 = vmatprep.subr.mxu0 0.0
    %260 = vmatpush1.msra.mxu0 0.0
    %261 = vmatprep.subr.mxu0 0.0
    %262 = vmatpush1.msra.mxu0 0.0
    %263 = vmatprep.subr.mxu0 0.0
    %264 = vmatpush1.msra.mxu0 0.0
    %265 = vmatprep.subr.mxu0 0.0
    %266 = vmatpush1.msra.mxu0 0.0
    %267 = vmatprep.subr.mxu0 0.0
    %268 = vmatpush1.msra.mxu0 0.0
    %269 = vmatprep.subr.mxu0 0.0
    %270 = vmatpush1.msra.mxu0 0.0
    %271 = vmatprep.subr.mxu0 0.0
    %272 = vmatpush1.msra.mxu0 0.0
    %273 = vmatprep.subr.mxu0 0.0
    %274 = vmatpush1.msra.mxu0 0.0
    %275 = vmatprep.mubr.f32.mxu0 0.0
    %276 = vmatmul.mubr.f32.gmra.mrb[0].mxu0 %v209
    %v277 = vpop.f32.mrb[0].mxu0
    %v278 = vadd.f32 0.0, %v277
    %v279 = vpop.f32.mrb[0].mxu0
    %280 = vdwg.mxu0
    %v281 = vld [vmem:[%s3] sm:$0xff]
    %v282 = vld [vmem:[%s3 + $0x8] sm:$0xff]
    %v283 = vld [vmem:[%s3 + $0x10] sm:$0xff]
    %v284 = vld [vmem:[%s3 + $0x18] sm:$0xff]
    %v285 = vld [vmem:[%s3 + $0x20] sm:$0xff]
    %v286 = vld [vmem:[%s3 + $0x28] sm:$0xff]
    %v287 = vld [vmem:[%s3 + $0x30] sm:$0xff]
    %v288 = vld [vmem:[%s3 + $0x38] sm:$0xff]
    %v289 = vld [vmem:[#allocation2 + $0x50] sm:$0xff]
    %v290 = vld [vmem:[#allocation2 + $0x58] sm:$0xff]
    %v291 = vld [vmem:[#allocation2 + $0x60] sm:$0xff]
    %v292 = vld [vmem:[#allocation2 + $0x68] sm:$0xff]
    %v293 = vlaneseq
    %v294 = vshrl.u32 %v293, 7
    %v295 = vsub.s32 2, %v294
    %v296 = vrot.slane %v37, %v295
    %v298 = vsel %vm47, %v281, 0
    %v301 = vsel %vm47, %v282, 0
    %v304 = vsel %vm47, %v283, 0
    %v307 = vsel %vm47, %v284, 0
    %v310 = vsel %vm47, %v285, 0
    %v313 = vsel %vm47, %v286, 0
    %v316 = vsel %vm47, %v287, 0
    %v319 = vsel %vm47, %v288, 0
    %321 = vmatprep.subr.mxu0 0.0
    %322 = vmatpush1.msra.mxu0 %v289
    %323 = vmatprep.subr.mxu0 0.0
    %324 = vmatpush1.msra.mxu0 %v290
    %325 = vmatprep.subr.mxu0 0.0
    %326 = vmatpush1.msra.mxu0 %v291
    %327 = vmatprep.subr.mxu0 0.0
    %328 = vmatpush1.msra.mxu0 %v292
    %329 = vmatprep.subr.mxu0 0.0
    %330 = vmatpush1.msra.mxu0 0.0
    %331 = vmatprep.subr.mxu0 0.0
    %332 = vmatpush1.msra.mxu0 0.0
    %333 = vmatprep.subr.mxu0 0.0
    %334 = vmatpush1.msra.mxu0 0.0
    %335 = vmatprep.subr.mxu0 0.0
    %336 = vmatpush1.msra.mxu0 0.0
    %337 = vmatprep.subr.mxu0 0.0
    %338 = vmatpush1.msra.mxu0 0.0
    %339 = vmatprep.subr.mxu0 0.0
    %340 = vmatpush1.msra.mxu0 0.0
    %341 = vmatprep.subr.mxu0 0.0
    %342 = vmatpush1.msra.mxu0 0.0
    %343 = vmatprep.subr.mxu0 0.0
    %344 = vmatpush1.msra.mxu0 0.0
    %345 = vmatprep.subr.mxu0 0.0
    %346 = vmatpush1.msra.mxu0 0.0
    %347 = vmatprep.subr.mxu0 0.0
    %348 = vmatpush1.msra.mxu0 0.0
    %349 = vmatprep.subr.mxu0 0.0
    %350 = vmatpush1.msra.mxu0 0.0
    %351 = vmatprep.subr.mxu0 0.0
    %352 = vmatpush1.msra.mxu0 0.0
    %353 = vmatprep.subr.mxu0 0.0
    %354 = vmatpush1.msra.mxu0 0.0
    %355 = vmatprep.subr.mxu0 0.0
    %356 = vmatpush1.msra.mxu0 0.0
    %357 = vmatprep.subr.mxu0 0.0
    %358 = vmatpush1.msra.mxu0 0.0
    %359 = vmatprep.subr.mxu0 0.0
    %360 = vmatpush1.msra.mxu0 0.0
    %361 = vmatprep.subr.mxu0 0.0
    %362 = vmatpush1.msra.mxu0 0.0
    %363 = vmatprep.subr.mxu0 0.0
    %364 = vmatpush1.msra.mxu0 0.0
    %365 = vmatprep.subr.mxu0 0.0
    %366 = vmatpush1.msra.mxu0 0.0
    %367 = vmatprep.subr.mxu0 0.0
    %368 = vmatpush1.msra.mxu0 0.0
    %369 = vmatprep.subr.mxu0 0.0
    %370 = vmatpush1.msra.mxu0 0.0
    %371 = vmatprep.subr.mxu0 0.0
    %372 = vmatpush1.msra.mxu0 0.0
    %373 = vmatprep.subr.mxu0 0.0
    %374 = vmatpush1.msra.mxu0 0.0
    %375 = vmatprep.subr.mxu0 0.0
    %376 = vmatpush1.msra.mxu0 0.0
    %377 = vmatprep.subr.mxu0 0.0
    %378 = vmatpush1.msra.mxu0 0.0
    %379 = vmatprep.subr.mxu0 0.0
    %380 = vmatpush1.msra.mxu0 0.0
    %381 = vmatprep.subr.mxu0 0.0
    %382 = vmatpush1.msra.mxu0 0.0
    %383 = vmatprep.subr.mxu0 0.0
    %384 = vmatpush1.msra.mxu0 0.0
    %385 = vmatprep.mubr.f32.mxu0 0.0
    %386 = vmatmul.mubr.f32.gmra.mrb[0].mxu0 %v298
    %v387 = vpop.f32.mrb[0].mxu0
    %v388 = vadd.f32 %v296, %v387
    %v389 = vpop.f32.mrb[0].mxu0
    %390 = vmatprep.mubr.f32.mxu0 0.0
    %391 = vmatmul.mubr.f32.gmra.mrb[0].mxu0 %v301
    %v392 = vpop.f32.mrb[0].mxu0
    %v393 = vadd.f32 %v296, %v392
    %v394 = vpop.f32.mrb[0].mxu0
    %395 = vmatprep.mubr.f32.mxu0 0.0
    %396 = vmatmul.mubr.f32.gmra.mrb[0].mxu0 %v304
    %v397 = vpop.f32.mrb[0].mxu0
    %v398 = vadd.f32 %v296, %v397
    %v399 = vpop.f32.mrb[0].mxu0
    %400 = vmatprep.mubr.f32.mxu0 0.0
    %401 = vmatmul.mubr.f32.gmra.mrb[0].mxu0 %v307
    %v402 = vpop.f32.mrb[0].mxu0
    %v403 = vadd.f32 %v296, %v402
    %v404 = vpop.f32.mrb[0].mxu0
    %405 = vmatprep.mubr.f32.mxu0 0.0
    %406 = vmatmul.mubr.f32.gmra.mrb[0].mxu0 %v310
    %v407 = vpop.f32.mrb[0].mxu0
    %v408 = vadd.f32 %v296, %v407
    %v409 = vpop.f32.mrb[0].mxu0
    %410 = vmatprep.mubr.f32.mxu0 0.0
    %411 = vmatmul.mubr.f32.gmra.mrb[0].mxu0 %v313
    %v412 = vpop.f32.mrb[0].mxu0
    %v413 = vadd.f32 %v296, %v412
    %v414 = vpop.f32.mrb[0].mxu0
    %415 = vmatprep.mubr.f32.mxu0 0.0
    %416 = vmatmul.mubr.f32.gmra.mrb[0].mxu0 %v316
    %v417 = vpop.f32.mrb[0].mxu0
    %v418 = vadd.f32 %v296, %v417
    %v419 = vpop.f32.mrb[0].mxu0
    %420 = vmatprep.mubr.f32.mxu0 0.0
    %421 = vmatmul.mubr.f32.gmra.mrb[0].mxu0 %v319
    %v422 = vpop.f32.mrb[0].mxu0
    %v423 = vadd.f32 %v296, %v422
    %v424 = vpop.f32.mrb[0].mxu0
    %425 = vdwg.mxu0
    %v426 = vlaneseq
    %v427 = vand.u32 %v426, 127
    %vm428 = vcmp.ge.s32.totalorder %v427, 32
    %vm429 = vcmp.lt.s32.totalorder %v427, 48
    %vm430 = vmand %vm428, %vm429
    %v431 = vsel %vm430, 2.0, 1.0
    %v432 = vsel %vm430, -1.0, 0.0
    %v433 = vld [vmem:[#allocation2 + $0x70] sm:$0xff]
    %v434 = vld [vmem:[#allocation2 + $0x78] sm:$0xff]
    %v435 = vld [vmem:[%s4] sm:$0xff]
    %v436 = vld [vmem:[%s5] sm:$0xff]
    %v438 = vsel %vm207, %v435, 0
    %440 = vmatprep.subr.mxu0 0.0
    %441 = vmatpush1.msra.mxu0 %v433
    %442 = vmatprep.subr.mxu0 0.0
    %443 = vmatpush1.msra.mxu0 %v434
    %444 = vmatprep.subr.mxu0 0.0
    %445 = vmatpush1.msra.mxu0 0.0
    %446 = vmatprep.subr.mxu0 0.0
    %447 = vmatpush1.msra.mxu0 0.0
    %448 = vmatprep.subr.mxu0 0.0
    %449 = vmatpush1.msra.mxu0 0.0
    %450 = vmatprep.subr.mxu0 0.0
    %451 = vmatpush1.msra.mxu0 0.0
    %452 = vmatprep.subr.mxu0 0.0
    %453 = vmatpush1.msra.mxu0 0.0
    %454 = vmatprep.subr.mxu0 0.0
    %455 = vmatpush1.msra.mxu0 0.0
    %456 = vmatprep.subr.mxu0 0.0
    %457 = vmatpush1.msra.mxu0 0.0
    %458 = vmatprep.subr.mxu0 0.0
    %459 = vmatpush1.msra.mxu0 0.0
    %460 = vmatprep.subr.mxu0 0.0
    %461 = vmatpush1.msra.mxu0 0.0
    %462 = vmatprep.subr.mxu0 0.0
    %463 = vmatpush1.msra.mxu0 0.0
    %464 = vmatprep.subr.mxu0 0.0
    %465 = vmatpush1.msra.mxu0 0.0
    %466 = vmatprep.subr.mxu0 0.0
    %467 = vmatpush1.msra.mxu0 0.0
    %468 = vmatprep.subr.mxu0 0.0
    %469 = vmatpush1.msra.mxu0 0.0
    %470 = vmatprep.subr.mxu0 0.0
    %471 = vmatpush1.msra.mxu0 0.0
    %472 = vmatprep.subr.mxu0 0.0
    %473 = vmatpush1.msra.mxu0 0.0
    %474 = vmatprep.subr.mxu0 0.0
    %475 = vmatpush1.msra.mxu0 0.0
    %476 = vmatprep.subr.mxu0 0.0
    %477 = vmatpush1.msra.mxu0 0.0
    %478 = vmatprep.subr.mxu0 0.0
    %479 = vmatpush1.msra.mxu0 0.0
    %480 = vmatprep.subr.mxu0 0.0
    %481 = vmatpush1.msra.mxu0 0.0
    %482 = vmatprep.subr.mxu0 0.0
    %483 = vmatpush1.msra.mxu0 0.0
    %484 = vmatprep.subr.mxu0 0.0
    %485 = vmatpush1.msra.mxu0 0.0
    %486 = vmatprep.subr.mxu0 0.0
    %487 = vmatpush1.msra.mxu0 0.0
    %488 = vmatprep.subr.mxu0 0.0
    %489 = vmatpush1.msra.mxu0 0.0
    %490 = vmatprep.subr.mxu0 0.0
    %491 = vmatpush1.msra.mxu0 0.0
    %492 = vmatprep.subr.mxu0 0.0
    %493 = vmatpush1.msra.mxu0 0.0
    %494 = vmatprep.subr.mxu0 0.0
    %495 = vmatpush1.msra.mxu0 0.0
    %496 = vmatprep.subr.mxu0 0.0
    %497 = vmatpush1.msra.mxu0 0.0
    %498 = vmatprep.subr.mxu0 0.0
    %499 = vmatpush1.msra.mxu0 0.0
    %500 = vmatprep.subr.mxu0 0.0
    %501 = vmatpush1.msra.mxu0 0.0
    %502 = vmatprep.subr.mxu0 0.0
    %503 = vmatpush1.msra.mxu0 0.0
    %504 = vmatprep.mubr.f32.mxu0 0.0
    %505 = vmatmul.mubr.f32.gmra.mrb[0].mxu0 %v438
    %v506 = vpop.f32.mrb[0].mxu0
    %v507 = vadd.f32 0.0, %v506
    %v508 = vpop.f32.mrb[0].mxu0
    %509 = vdwg.mxu0
    %v510 = vadd.f32 %v388, %v507
    %v511 = vxor.u32 %v510, 2147483648
    %v512 = vmul.f32 %v511, 1.442695
    %v513 = vpow.pop %v512
    %v514 = vadd.f32 %v513, 1.0
    %v515 = vrcp.pop %v514
    %v516 = vmul.f32 1.0, %v515
    %v517 = vmul.f32 %v516, %v431
    %v518 = vadd.f32 %v517, %v432
    %520 = vrot.lane.b32.xlu0 %v436, 16
    %v521 = vpop.permute.xlu0 %520
    %v523 = vmul.f32 %v518, %v521
    %525 = vrot.lane.b32.xlu0 %v518, 96
    %v526 = vpop.permute.xlu0 %525
    %v528 = vmul.f32 %v518, %v526
    %530 = vrot.lane.b32.xlu0 %v528, 16
    %v531 = vpop.permute.xlu0 %530
    %v533 = vadd.f32 %v523, %v531
    %v534 = vtanh.pop %v533
    %536 = vrot.lane.b32.xlu0 %v534, 32
    %v537 = vpop.permute.xlu0 %536
    %v539 = vmul.f32 %v518, %v537
    %541 = vrot.lane.b32.xlu0 %v539, 80
    %v542 = vpop.permute.xlu0 %541
    %v543 = vsel %vm207, %v542, 0
    %545 = vmatprep.subr.mxu0 0.0
    %546 = vmatpush1.msra.mxu0 %v433
    %547 = vmatprep.subr.mxu0 0.0
    %548 = vmatpush1.msra.mxu0 %v434
    %549 = vmatprep.subr.mxu0 0.0
    %550 = vmatpush1.msra.mxu0 0.0
    %551 = vmatprep.subr.mxu0 0.0
    %552 = vmatpush1.msra.mxu0 0.0
    %553 = vmatprep.subr.mxu0 0.0
    %554 = vmatpush1.msra.mxu0 0.0
    %555 = vmatprep.subr.mxu0 0.0
    %556 = vmatpush1.msra.mxu0 0.0
    %557 = vmatprep.subr.mxu0 0.0
    %558 = vmatpush1.msra.mxu0 0.0
    %559 = vmatprep.subr.mxu0 0.0
    %560 = vmatpush1.msra.mxu0 0.0
    %561 = vmatprep.subr.mxu0 0.0
    %562 = vmatpush1.msra.mxu0 0.0
    %563 = vmatprep.subr.mxu0 0.0
    %564 = vmatpush1.msra.mxu0 0.0
    %565 = vmatprep.subr.mxu0 0.0
    %566 = vmatpush1.msra.mxu0 0.0
    %567 = vmatprep.subr.mxu0 0.0
    %568 = vmatpush1.msra.mxu0 0.0
    %569 = vmatprep.subr.mxu0 0.0
    %570 = vmatpush1.msra.mxu0 0.0
    %571 = vmatprep.subr.mxu0 0.0
    %572 = vmatpush1.msra.mxu0 0.0
    %573 = vmatprep.subr.mxu0 0.0
    %574 = vmatpush1.msra.mxu0 0.0
    %575 = vmatprep.subr.mxu0 0.0
    %576 = vmatpush1.msra.mxu0 0.0
    %577 = vmatprep.subr.mxu0 0.0
    %578 = vmatpush1.msra.mxu0 0.0
    %579 = vmatprep.subr.mxu0 0.0
    %580 = vmatpush1.msra.mxu0 0.0
    %581 = vmatprep.subr.mxu0 0.0
    %582 = vmatpush1.msra.mxu0 0.0
    %583 = vmatprep.subr.mxu0 0.0
    %584 = vmatpush1.msra.mxu0 0.0
    %585 = vmatprep.subr.mxu0 0.0
    %586 = vmatpush1.msra.mxu0 0.0
    %587 = vmatprep.subr.mxu0 0.0
    %588 = vmatpush1.msra.mxu0 0.0
    %589 = vmatprep.subr.mxu0 0.0
    %590 = vmatpush1.msra.mxu0 0.0
    %591 = vmatprep.subr.mxu0 0.0
    %592 = vmatpush1.msra.mxu0 0.0
    %593 = vmatprep.subr.mxu0 0.0
    %594 = vmatpush1.msra.mxu0 0.0
    %595 = vmatprep.subr.mxu0 0.0
    %596 = vmatpush1.msra.mxu0 0.0
    %597 = vmatprep.subr.mxu0 0.0
    %598 = vmatpush1.msra.mxu0 0.0
    %599 = vmatprep.subr.mxu0 0.0
    %600 = vmatpush1.msra.mxu0 0.0
    %601 = vmatprep.subr.mxu0 0.0
    %602 = vmatpush1.msra.mxu0 0.0
    %603 = vmatprep.subr.mxu0 0.0
    %604 = vmatpush1.msra.mxu0 0.0
    %605 = vmatprep.subr.mxu0 0.0
    %606 = vmatpush1.msra.mxu0 0.0
    %607 = vmatprep.subr.mxu0 0.0
    %608 = vmatpush1.msra.mxu0 0.0
    %609 = vmatprep.mubr.f32.mxu0 0.0
    %610 = vmatmul.mubr.f32.gmra.mrb[0].mxu0 %v543
    %v611 = vpop.f32.mrb[0].mxu0
    %v612 = vadd.f32 0.0, %v611
    %v613 = vpop.f32.mrb[0].mxu0
    %614 = vdwg.mxu0
    %v615 = vadd.f32 %v393, %v612
    %v616 = vxor.u32 %v615, 2147483648
    %v617 = vmul.f32 %v616, 1.442695
    %v618 = vpow.pop %v617
    %v619 = vadd.f32 %v618, 1.0
    %v620 = vrcp.pop %v619
    %v621 = vmul.f32 1.0, %v620
    %v622 = vmul.f32 %v621, %v431
    %v623 = vadd.f32 %v622, %v432
    %v624 = vmul.f32 %v623, %v533
    %626 = vrot.lane.b32.xlu0 %v623, 96
    %v627 = vpop.permute.xlu0 %626
    %v629 = vmul.f32 %v623, %v627
    %631 = vrot.lane.b32.xlu0 %v629, 16
    %v632 = vpop.permute.xlu0 %631
    %v634 = vadd.f32 %v624, %v632
    %v635 = vtanh.pop %v634
    %637 = vrot.lane.b32.xlu0 %v635, 32
    %v638 = vpop.permute.xlu0 %637
    %v640 = vmul.f32 %v623, %v638
    %642 = vrot.lane.b32.xlu0 %v640, 80
    %v643 = vpop.permute.xlu0 %642
    %v644 = vsel %vm207, %v643, 0
    %646 = vmatprep.subr.mxu0 0.0
    %647 = vmatpush1.msra.mxu0 %v433
    %648 = vmatprep.subr.mxu0 0.0
    %649 = vmatpush1.msra.mxu0 %v434
    %650 = vmatprep.subr.mxu0 0.0
    %651 = vmatpush1.msra.mxu0 0.0
    %652 = vmatprep.subr.mxu0 0.0
    %653 = vmatpush1.msra.mxu0 0.0
    %654 = vmatprep.subr.mxu0 0.0
    %655 = vmatpush1.msra.mxu0 0.0
    %656 = vmatprep.subr.mxu0 0.0
    %657 = vmatpush1.msra.mxu0 0.0
    %658 = vmatprep.subr.mxu0 0.0
    %659 = vmatpush1.msra.mxu0 0.0
    %660 = vmatprep.subr.mxu0 0.0
    %661 = vmatpush1.msra.mxu0 0.0
    %662 = vmatprep.subr.mxu0 0.0
    %663 = vmatpush1.msra.mxu0 0.0
    %664 = vmatprep.subr.mxu0 0.0
    %665 = vmatpush1.msra.mxu0 0.0
    %666 = vmatprep.subr.mxu0 0.0
    %667 = vmatpush1.msra.mxu0 0.0
    %668 = vmatprep.subr.mxu0 0.0
    %669 = vmatpush1.msra.mxu0 0.0
    %670 = vmatprep.subr.mxu0 0.0
    %671 = vmatpush1.msra.mxu0 0.0
    %672 = vmatprep.subr.mxu0 0.0
    %673 = vmatpush1.msra.mxu0 0.0
    %674 = vmatprep.subr.mxu0 0.0
    %675 = vmatpush1.msra.mxu0 0.0
    %676 = vmatprep.subr.mxu0 0.0
    %677 = vmatpush1.msra.mxu0 0.0
    %678 = vmatprep.subr.mxu0 0.0
    %679 = vmatpush1.msra.mxu0 0.0
    %680 = vmatprep.subr.mxu0 0.0
    %681 = vmatpush1.msra.mxu0 0.0
    %682 = vmatprep.subr.mxu0 0.0
    %683 = vmatpush1.msra.mxu0 0.0
    %684 = vmatprep.subr.mxu0 0.0
    %685 = vmatpush1.msra.mxu0 0.0
    %686 = vmatprep.subr.mxu0 0.0
    %687 = vmatpush1.msra.mxu0 0.0
    %688 = vmatprep.subr.mxu0 0.0
    %689 = vmatpush1.msra.mxu0 0.0
    %690 = vmatprep.subr.mxu0 0.0
    %691 = vmatpush1.msra.mxu0 0.0
    %692 = vmatprep.subr.mxu0 0.0
    %693 = vmatpush1.msra.mxu0 0.0
    %694 = vmatprep.subr.mxu0 0.0
    %695 = vmatpush1.msra.mxu0 0.0
    %696 = vmatprep.subr.mxu0 0.0
    %697 = vmatpush1.msra.mxu0 0.0
    %698 = vmatprep.subr.mxu0 0.0
    %699 = vmatpush1.msra.mxu0 0.0
    %700 = vmatprep.subr.mxu0 0.0
    %701 = vmatpush1.msra.mxu0 0.0
    %702 = vmatprep.subr.mxu0 0.0
    %703 = vmatpush1.msra.mxu0 0.0
    %704 = vmatprep.subr.mxu0 0.0
    %705 = vmatpush1.msra.mxu0 0.0
    %706 = vmatprep.subr.mxu0 0.0
    %707 = vmatpush1.msra.mxu0 0.0
    %708 = vmatprep.subr.mxu0 0.0
    %709 = vmatpush1.msra.mxu0 0.0
    %710 = vmatprep.mubr.f32.mxu0 0.0
    %711 = vmatmul.mubr.f32.gmra.mrb[0].mxu0 %v644
    %v712 = vpop.f32.mrb[0].mxu0
    %v713 = vadd.f32 0.0, %v712
    %v714 = vpop.f32.mrb[0].mxu0
    %715 = vdwg.mxu0
    %v716 = vadd.f32 %v398, %v713
    %v717 = vxor.u32 %v716, 2147483648
    %v718 = vmul.f32 %v717, 1.442695
    %v719 = vpow.pop %v718
    %v720 = vadd.f32 %v719, 1.0
    %v721 = vrcp.pop %v720
    %v722 = vmul.f32 1.0, %v721
    %v723 = vmul.f32 %v722, %v431
    %v724 = vadd.f32 %v723, %v432
    %v725 = vmul.f32 %v724, %v634
    %727 = vrot.lane.b32.xlu0 %v724, 96
    %v728 = vpop.permute.xlu0 %727
    %v730 = vmul.f32 %v724, %v728
    %732 = vrot.lane.b32.xlu0 %v730, 16
    %v733 = vpop.permute.xlu0 %732
    %v735 = vadd.f32 %v725, %v733
    %v736 = vtanh.pop %v735
    %738 = vrot.lane.b32.xlu0 %v736, 32
    %v739 = vpop.permute.xlu0 %738
    %v741 = vmul.f32 %v724, %v739
    %743 = vrot.lane.b32.xlu0 %v741, 80
    %v744 = vpop.permute.xlu0 %743
    %v745 = vsel %vm207, %v744, 0
    %747 = vmatprep.subr.mxu0 0.0
    %748 = vmatpush1.msra.mxu0 %v433
    %749 = vmatprep.subr.mxu0 0.0
    %750 = vmatpush1.msra.mxu0 %v434
    %751 = vmatprep.subr.mxu0 0.0
    %752 = vmatpush1.msra.mxu0 0.0
    %753 = vmatprep.subr.mxu0 0.0
    %754 = vmatpush1.msra.mxu0 0.0
    %755 = vmatprep.subr.mxu0 0.0
    %756 = vmatpush1.msra.mxu0 0.0
    %757 = vmatprep.subr.mxu0 0.0
    %758 = vmatpush1.msra.mxu0 0.0
    %759 = vmatprep.subr.mxu0 0.0
    %760 = vmatpush1.msra.mxu0 0.0
    %761 = vmatprep.subr.mxu0 0.0
    %762 = vmatpush1.msra.mxu0 0.0
    %763 = vmatprep.subr.mxu0 0.0
    %764 = vmatpush1.msra.mxu0 0.0
    %765 = vmatprep.subr.mxu0 0.0
    %766 = vmatpush1.msra.mxu0 0.0
    %767 = vmatprep.subr.mxu0 0.0
    %768 = vmatpush1.msra.mxu0 0.0
    %769 = vmatprep.subr.mxu0 0.0
    %770 = vmatpush1.msra.mxu0 0.0
    %771 = vmatprep.subr.mxu0 0.0
    %772 = vmatpush1.msra.mxu0 0.0
    %773 = vmatprep.subr.mxu0 0.0
    %774 = vmatpush1.msra.mxu0 0.0
    %775 = vmatprep.subr.mxu0 0.0
    %776 = vmatpush1.msra.mxu0 0.0
    %777 = vmatprep.subr.mxu0 0.0
    %778 = vmatpush1.msra.mxu0 0.0
    %779 = vmatprep.subr.mxu0 0.0
    %780 = vmatpush1.msra.mxu0 0.0
    %781 = vmatprep.subr.mxu0 0.0
    %782 = vmatpush1.msra.mxu0 0.0
    %783 = vmatprep.subr.mxu0 0.0
    %784 = vmatpush1.msra.mxu0 0.0
    %785 = vmatprep.subr.mxu0 0.0
    %786 = vmatpush1.msra.mxu0 0.0
    %787 = vmatprep.subr.mxu0 0.0
    %788 = vmatpush1.msra.mxu0 0.0
    %789 = vmatprep.subr.mxu0 0.0
    %790 = vmatpush1.msra.mxu0 0.0
    %791 = vmatprep.subr.mxu0 0.0
    %792 = vmatpush1.msra.mxu0 0.0
    %793 = vmatprep.subr.mxu0 0.0
    %794 = vmatpush1.msra.mxu0 0.0
    %795 = vmatprep.subr.mxu0 0.0
    %796 = vmatpush1.msra.mxu0 0.0
    %797 = vmatprep.subr.mxu0 0.0
    %798 = vmatpush1.msra.mxu0 0.0
    %799 = vmatprep.subr.mxu0 0.0
    %800 = vmatpush1.msra.mxu0 0.0
    %801 = vmatprep.subr.mxu0 0.0
    %802 = vmatpush1.msra.mxu0 0.0
    %803 = vmatprep.subr.mxu0 0.0
    %804 = vmatpush1.msra.mxu0 0.0
    %805 = vmatprep.subr.mxu0 0.0
    %806 = vmatpush1.msra.mxu0 0.0
    %807 = vmatprep.subr.mxu0 0.0
    %808 = vmatpush1.msra.mxu0 0.0
    %809 = vmatprep.subr.mxu0 0.0
    %810 = vmatpush1.msra.mxu0 0.0
    %811 = vmatprep.mubr.f32.mxu0 0.0
    %812 = vmatmul.mubr.f32.gmra.mrb[0].mxu0 %v745
    %v813 = vpop.f32.mrb[0].mxu0
    %v814 = vadd.f32 0.0, %v813
    %v815 = vpop.f32.mrb[0].mxu0
    %816 = vdwg.mxu0
    %v817 = vadd.f32 %v403, %v814
    %v818 = vxor.u32 %v817, 2147483648
    %v819 = vmul.f32 %v818, 1.442695
    %v820 = vpow.pop %v819
    %v821 = vadd.f32 %v820, 1.0
    %v822 = vrcp.pop %v821
    %v823 = vmul.f32 1.0, %v822
    %v824 = vmul.f32 %v823, %v431
    %v825 = vadd.f32 %v824, %v432
    %v826 = vmul.f32 %v825, %v735
    %828 = vrot.lane.b32.xlu0 %v825, 96
    %v829 = vpop.permute.xlu0 %828
    %v831 = vmul.f32 %v825, %v829
    %833 = vrot.lane.b32.xlu0 %v831, 16
    %v834 = vpop.permute.xlu0 %833
    %v836 = vadd.f32 %v826, %v834
    %v837 = vtanh.pop %v836
    %839 = vrot.lane.b32.xlu0 %v837, 32
    %v840 = vpop.permute.xlu0 %839
    %v842 = vmul.f32 %v825, %v840
    %844 = vrot.lane.b32.xlu0 %v842, 80
    %v845 = vpop.permute.xlu0 %844
    %v846 = vsel %vm207, %v845, 0
    %848 = vmatprep.subr.mxu0 0.0
    %849 = vmatpush1.msra.mxu0 %v433
    %850 = vmatprep.subr.mxu0 0.0
    %851 = vmatpush1.msra.mxu0 %v434
    %852 = vmatprep.subr.mxu0 0.0
    %853 = vmatpush1.msra.mxu0 0.0
    %854 = vmatprep.subr.mxu0 0.0
    %855 = vmatpush1.msra.mxu0 0.0
    %856 = vmatprep.subr.mxu0 0.0
    %857 = vmatpush1.msra.mxu0 0.0
    %858 = vmatprep.subr.mxu0 0.0
    %859 = vmatpush1.msra.mxu0 0.0
    %860 = vmatprep.subr.mxu0 0.0
    %861 = vmatpush1.msra.mxu0 0.0
    %862 = vmatprep.subr.mxu0 0.0
    %863 = vmatpush1.msra.mxu0 0.0
    %864 = vmatprep.subr.mxu0 0.0
    %865 = vmatpush1.msra.mxu0 0.0
    %866 = vmatprep.subr.mxu0 0.0
    %867 = vmatpush1.msra.mxu0 0.0
    %868 = vmatprep.subr.mxu0 0.0
    %869 = vmatpush1.msra.mxu0 0.0
    %870 = vmatprep.subr.mxu0 0.0
    %871 = vmatpush1.msra.mxu0 0.0
    %872 = vmatprep.subr.mxu0 0.0
    %873 = vmatpush1.msra.mxu0 0.0
    %874 = vmatprep.subr.mxu0 0.0
    %875 = vmatpush1.msra.mxu0 0.0
    %876 = vmatprep.subr.mxu0 0.0
    %877 = vmatpush1.msra.mxu0 0.0
    %878 = vmatprep.subr.mxu0 0.0
    %879 = vmatpush1.msra.mxu0 0.0
    %880 = vmatprep.subr.mxu0 0.0
    %881 = vmatpush1.msra.mxu0 0.0
    %882 = vmatprep.subr.mxu0 0.0
    %883 = vmatpush1.msra.mxu0 0.0
    %884 = vmatprep.subr.mxu0 0.0
    %885 = vmatpush1.msra.mxu0 0.0
    %886 = vmatprep.subr.mxu0 0.0
    %887 = vmatpush1.msra.mxu0 0.0
    %888 = vmatprep.subr.mxu0 0.0
    %889 = vmatpush1.msra.mxu0 0.0
    %890 = vmatprep.subr.mxu0 0.0
    %891 = vmatpush1.msra.mxu0 0.0
    %892 = vmatprep.subr.mxu0 0.0
    %893 = vmatpush1.msra.mxu0 0.0
    %894 = vmatprep.subr.mxu0 0.0
    %895 = vmatpush1.msra.mxu0 0.0
    %896 = vmatprep.subr.mxu0 0.0
    %897 = vmatpush1.msra.mxu0 0.0
    %898 = vmatprep.subr.mxu0 0.0
    %899 = vmatpush1.msra.mxu0 0.0
    %900 = vmatprep.subr.mxu0 0.0
    %901 = vmatpush1.msra.mxu0 0.0
    %902 = vmatprep.subr.mxu0 0.0
    %903 = vmatpush1.msra.mxu0 0.0
    %904 = vmatprep.subr.mxu0 0.0
    %905 = vmatpush1.msra.mxu0 0.0
    %906 = vmatprep.subr.mxu0 0.0
    %907 = vmatpush1.msra.mxu0 0.0
    %908 = vmatprep.subr.mxu0 0.0
    %909 = vmatpush1.msra.mxu0 0.0
    %910 = vmatprep.subr.mxu0 0.0
    %911 = vmatpush1.msra.mxu0 0.0
    %912 = vmatprep.mubr.f32.mxu0 0.0
    %913 = vmatmul.mubr.f32.gmra.mrb[0].mxu0 %v846
    %v914 = vpop.f32.mrb[0].mxu0
    %v915 = vadd.f32 0.0, %v914
    %v916 = vpop.f32.mrb[0].mxu0
    %917 = vdwg.mxu0
    %v918 = vadd.f32 %v408, %v915
    %v919 = vxor.u32 %v918, 2147483648
    %v920 = vmul.f32 %v919, 1.442695
    %v921 = vpow.pop %v920
    %v922 = vadd.f32 %v921, 1.0
    %v923 = vrcp.pop %v922
    %v924 = vmul.f32 1.0, %v923
    %v925 = vmul.f32 %v924, %v431
    %v926 = vadd.f32 %v925, %v432
    %v927 = vmul.f32 %v926, %v836
    %929 = vrot.lane.b32.xlu0 %v926, 96
    %v930 = vpop.permute.xlu0 %929
    %v932 = vmul.f32 %v926, %v930
    %934 = vrot.lane.b32.xlu0 %v932, 16
    %v935 = vpop.permute.xlu0 %934
    %v937 = vadd.f32 %v927, %v935
    %v938 = vtanh.pop %v937
    %940 = vrot.lane.b32.xlu0 %v938, 32
    %v941 = vpop.permute.xlu0 %940
    %v943 = vmul.f32 %v926, %v941
    %945 = vrot.lane.b32.xlu0 %v943, 80
    %v946 = vpop.permute.xlu0 %945
    %v947 = vsel %vm207, %v946, 0
    %949 = vmatprep.subr.mxu0 0.0
    %950 = vmatpush1.msra.mxu0 %v433
    %951 = vmatprep.subr.mxu0 0.0
    %952 = vmatpush1.msra.mxu0 %v434
    %953 = vmatprep.subr.mxu0 0.0
    %954 = vmatpush1.msra.mxu0 0.0
    %955 = vmatprep.subr.mxu0 0.0
    %956 = vmatpush1.msra.mxu0 0.0
    %957 = vmatprep.subr.mxu0 0.0
    %958 = vmatpush1.msra.mxu0 0.0
    %959 = vmatprep.subr.mxu0 0.0
    %960 = vmatpush1.msra.mxu0 0.0
    %961 = vmatprep.subr.mxu0 0.0
    %962 = vmatpush1.msra.mxu0 0.0
    %963 = vmatprep.subr.mxu0 0.0
    %964 = vmatpush1.msra.mxu0 0.0
    %965 = vmatprep.subr.mxu0 0.0
    %966 = vmatpush1.msra.mxu0 0.0
    %967 = vmatprep.subr.mxu0 0.0
    %968 = vmatpush1.msra.mxu0 0.0
    %969 = vmatprep.subr.mxu0 0.0
    %970 = vmatpush1.msra.mxu0 0.0
    %971 = vmatprep.subr.mxu0 0.0
    %972 = vmatpush1.msra.mxu0 0.0
    %973 = vmatprep.subr.mxu0 0.0
    %974 = vmatpush1.msra.mxu0 0.0
    %975 = vmatprep.subr.mxu0 0.0
    %976 = vmatpush1.msra.mxu0 0.0
    %977 = vmatprep.subr.mxu0 0.0
    %978 = vmatpush1.msra.mxu0 0.0
    %979 = vmatprep.subr.mxu0 0.0
    %980 = vmatpush1.msra.mxu0 0.0
    %981 = vmatprep.subr.mxu0 0.0
    %982 = vmatpush1.msra.mxu0 0.0
    %983 = vmatprep.subr.mxu0 0.0
    %984 = vmatpush1.msra.mxu0 0.0
    %985 = vmatprep.subr.mxu0 0.0
    %986 = vmatpush1.msra.mxu0 0.0
    %987 = vmatprep.subr.mxu0 0.0
    %988 = vmatpush1.msra.mxu0 0.0
    %989 = vmatprep.subr.mxu0 0.0
    %990 = vmatpush1.msra.mxu0 0.0
    %991 = vmatprep.subr.mxu0 0.0
    %992 = vmatpush1.msra.mxu0 0.0
    %993 = vmatprep.subr.mxu0 0.0
    %994 = vmatpush1.msra.mxu0 0.0
    %995 = vmatprep.subr.mxu0 0.0
    %996 = vmatpush1.msra.mxu0 0.0
    %997 = vmatprep.subr.mxu0 0.0
    %998 = vmatpush1.msra.mxu0 0.0
    %999 = vmatprep.subr.mxu0 0.0
    %1000 = vmatpush1.msra.mxu0 0.0
    %1001 = vmatprep.subr.mxu0 0.0
    %1002 = vmatpush1.msra.mxu0 0.0
    %1003 = vmatprep.subr.mxu0 0.0
    %1004 = vmatpush1.msra.mxu0 0.0
    %1005 = vmatprep.subr.mxu0 0.0
    %1006 = vmatpush1.msra.mxu0 0.0
    %1007 = vmatprep.subr.mxu0 0.0
    %1008 = vmatpush1.msra.mxu0 0.0
    %1009 = vmatprep.subr.mxu0 0.0
    %1010 = vmatpush1.msra.mxu0 0.0
    %1011 = vmatprep.subr.mxu0 0.0
    %1012 = vmatpush1.msra.mxu0 0.0
    %1013 = vmatprep.mubr.f32.mxu0 0.0
    %1014 = vmatmul.mubr.f32.gmra.mrb[0].mxu0 %v947
    %v1015 = vpop.f32.mrb[0].mxu0
    %v1016 = vadd.f32 0.0, %v1015
    %v1017 = vpop.f32.mrb[0].mxu0
    %1018 = vdwg.mxu0
    %v1019 = vadd.f32 %v413, %v1016
    %v1020 = vxor.u32 %v1019, 2147483648
    %v1021 = vmul.f32 %v1020, 1.442695
    %v1022 = vpow.pop %v1021
    %v1023 = vadd.f32 %v1022, 1.0
    %v1024 = vrcp.pop %v1023
    %v1025 = vmul.f32 1.0, %v1024
    %v1026 = vmul.f32 %v1025, %v431
    %v1027 = vadd.f32 %v1026, %v432
    %v1028 = vmul.f32 %v1027, %v937
    %1030 = vrot.lane.b32.xlu0 %v1027, 96
    %v1031 = vpop.permute.xlu0 %1030
    %v1033 = vmul.f32 %v1027, %v1031
    %1035 = vrot.lane.b32.xlu0 %v1033, 16
    %v1036 = vpop.permute.xlu0 %1035
    %v1038 = vadd.f32 %v1028, %v1036
    %v1039 = vtanh.pop %v1038
    %1041 = vrot.lane.b32.xlu0 %v1039, 32
    %v1042 = vpop.permute.xlu0 %1041
    %v1044 = vmul.f32 %v1027, %v1042
    %1046 = vrot.lane.b32.xlu0 %v1044, 80
    %v1047 = vpop.permute.xlu0 %1046
    %v1048 = vsel %vm207, %v1047, 0
    %1050 = vmatprep.subr.mxu0 0.0
    %1051 = vmatpush1.msra.mxu0 %v433
    %1052 = vmatprep.subr.mxu0 0.0
    %1053 = vmatpush1.msra.mxu0 %v434
    %1054 = vmatprep.subr.mxu0 0.0
    %1055 = vmatpush1.msra.mxu0 0.0
    %1056 = vmatprep.subr.mxu0 0.0
    %1057 = vmatpush1.msra.mxu0 0.0
    %1058 = vmatprep.subr.mxu0 0.0
    %1059 = vmatpush1.msra.mxu0 0.0
    %1060 = vmatprep.subr.mxu0 0.0
    %1061 = vmatpush1.msra.mxu0 0.0
    %1062 = vmatprep.subr.mxu0 0.0
    %1063 = vmatpush1.msra.mxu0 0.0
    %1064 = vmatprep.subr.mxu0 0.0
    %1065 = vmatpush1.msra.mxu0 0.0
    %1066 = vmatprep.subr.mxu0 0.0
    %1067 = vmatpush1.msra.mxu0 0.0
    %1068 = vmatprep.subr.mxu0 0.0
    %1069 = vmatpush1.msra.mxu0 0.0
    %1070 = vmatprep.subr.mxu0 0.0
    %1071 = vmatpush1.msra.mxu0 0.0
    %1072 = vmatprep.subr.mxu0 0.0
    %1073 = vmatpush1.msra.mxu0 0.0
    %1074 = vmatprep.subr.mxu0 0.0
    %1075 = vmatpush1.msra.mxu0 0.0
    %1076 = vmatprep.subr.mxu0 0.0
    %1077 = vmatpush1.msra.mxu0 0.0
    %1078 = vmatprep.subr.mxu0 0.0
    %1079 = vmatpush1.msra.mxu0 0.0
    %1080 = vmatprep.subr.mxu0 0.0
    %1081 = vmatpush1.msra.mxu0 0.0
    %1082 = vmatprep.subr.mxu0 0.0
    %1083 = vmatpush1.msra.mxu0 0.0
    %1084 = vmatprep.subr.mxu0 0.0
    %1085 = vmatpush1.msra.mxu0 0.0
    %1086 = vmatprep.subr.mxu0 0.0
    %1087 = vmatpush1.msra.mxu0 0.0
    %1088 = vmatprep.subr.mxu0 0.0
    %1089 = vmatpush1.msra.mxu0 0.0
    %1090 = vmatprep.subr.mxu0 0.0
    %1091 = vmatpush1.msra.mxu0 0.0
    %1092 = vmatprep.subr.mxu0 0.0
    %1093 = vmatpush1.msra.mxu0 0.0
    %1094 = vmatprep.subr.mxu0 0.0
    %1095 = vmatpush1.msra.mxu0 0.0
    %1096 = vmatprep.subr.mxu0 0.0
    %1097 = vmatpush1.msra.mxu0 0.0
    %1098 = vmatprep.subr.mxu0 0.0
    %1099 = vmatpush1.msra.mxu0 0.0
    %1100 = vmatprep.subr.mxu0 0.0
    %1101 = vmatpush1.msra.mxu0 0.0
    %1102 = vmatprep.subr.mxu0 0.0
    %1103 = vmatpush1.msra.mxu0 0.0
    %1104 = vmatprep.subr.mxu0 0.0
    %1105 = vmatpush1.msra.mxu0 0.0
    %1106 = vmatprep.subr.mxu0 0.0
    %1107 = vmatpush1.msra.mxu0 0.0
    %1108 = vmatprep.subr.mxu0 0.0
    %1109 = vmatpush1.msra.mxu0 0.0
    %1110 = vmatprep.subr.mxu0 0.0
    %1111 = vmatpush1.msra.mxu0 0.0
    %1112 = vmatprep.subr.mxu0 0.0
    %1113 = vmatpush1.msra.mxu0 0.0
    %1114 = vmatprep.mubr.f32.mxu0 0.0
    %1115 = vmatmul.mubr.f32.gmra.mrb[0].mxu0 %v1048
    %v1116 = vpop.f32.mrb[0].mxu0
    %v1117 = vadd.f32 0.0, %v1116
    %v1118 = vpop.f32.mrb[0].mxu0
    %1119 = vdwg.mxu0
    %v1120 = vadd.f32 %v418, %v1117
    %v1121 = vxor.u32 %v1120, 2147483648
    %v1122 = vmul.f32 %v1121, 1.442695
    %v1123 = vpow.pop %v1122
    %v1124 = vadd.f32 %v1123, 1.0
    %v1125 = vrcp.pop %v1124
    %v1126 = vmul.f32 1.0, %v1125
    %v1127 = vmul.f32 %v1126, %v431
    %v1128 = vadd.f32 %v1127, %v432
    %v1129 = vmul.f32 %v1128, %v1038
    %1131 = vrot.lane.b32.xlu0 %v1128, 96
    %v1132 = vpop.permute.xlu0 %1131
    %v1134 = vmul.f32 %v1128, %v1132
    %1136 = vrot.lane.b32.xlu0 %v1134, 16
    %v1137 = vpop.permute.xlu0 %1136
    %v1139 = vadd.f32 %v1129, %v1137
    %v1140 = vtanh.pop %v1139
    %1142 = vrot.lane.b32.xlu0 %v1140, 32
    %v1143 = vpop.permute.xlu0 %1142
    %v1145 = vmul.f32 %v1128, %v1143
    %1147 = vrot.lane.b32.xlu0 %v1145, 80
    %v1148 = vpop.permute.xlu0 %1147
    %v1149 = vsel %vm207, %v1148, 0
    %1151 = vmatprep.subr.mxu0 0.0
    %1152 = vmatpush1.msra.mxu0 %v433
    %1153 = vmatprep.subr.mxu0 0.0
    %1154 = vmatpush1.msra.mxu0 %v434
    %1155 = vmatprep.subr.mxu0 0.0
    %1156 = vmatpush1.msra.mxu0 0.0
    %1157 = vmatprep.subr.mxu0 0.0
    %1158 = vmatpush1.msra.mxu0 0.0
    %1159 = vmatprep.subr.mxu0 0.0
    %1160 = vmatpush1.msra.mxu0 0.0
    %1161 = vmatprep.subr.mxu0 0.0
    %1162 = vmatpush1.msra.mxu0 0.0
    %1163 = vmatprep.subr.mxu0 0.0
    %1164 = vmatpush1.msra.mxu0 0.0
    %1165 = vmatprep.subr.mxu0 0.0
    %1166 = vmatpush1.msra.mxu0 0.0
    %1167 = vmatprep.subr.mxu0 0.0
    %1168 = vmatpush1.msra.mxu0 0.0
    %1169 = vmatprep.subr.mxu0 0.0
    %1170 = vmatpush1.msra.mxu0 0.0
    %1171 = vmatprep.subr.mxu0 0.0
    %1172 = vmatpush1.msra.mxu0 0.0
    %1173 = vmatprep.subr.mxu0 0.0
    %1174 = vmatpush1.msra.mxu0 0.0
    %1175 = vmatprep.subr.mxu0 0.0
    %1176 = vmatpush1.msra.mxu0 0.0
    %1177 = vmatprep.subr.mxu0 0.0
    %1178 = vmatpush1.msra.mxu0 0.0
    %1179 = vmatprep.subr.mxu0 0.0
    %1180 = vmatpush1.msra.mxu0 0.0
    %1181 = vmatprep.subr.mxu0 0.0
    %1182 = vmatpush1.msra.mxu0 0.0
    %1183 = vmatprep.subr.mxu0 0.0
    %1184 = vmatpush1.msra.mxu0 0.0
    %1185 = vmatprep.subr.mxu0 0.0
    %1186 = vmatpush1.msra.mxu0 0.0
    %1187 = vmatprep.subr.mxu0 0.0
    %1188 = vmatpush1.msra.mxu0 0.0
    %1189 = vmatprep.subr.mxu0 0.0
    %1190 = vmatpush1.msra.mxu0 0.0
    %1191 = vmatprep.subr.mxu0 0.0
    %1192 = vmatpush1.msra.mxu0 0.0
    %1193 = vmatprep.subr.mxu0 0.0
    %1194 = vmatpush1.msra.mxu0 0.0
    %1195 = vmatprep.subr.mxu0 0.0
    %1196 = vmatpush1.msra.mxu0 0.0
    %1197 = vmatprep.subr.mxu0 0.0
    %1198 = vmatpush1.msra.mxu0 0.0
    %1199 = vmatprep.subr.mxu0 0.0
    %1200 = vmatpush1.msra.mxu0 0.0
    %1201 = vmatprep.subr.mxu0 0.0
    %1202 = vmatpush1.msra.mxu0 0.0
    %1203 = vmatprep.subr.mxu0 0.0
    %1204 = vmatpush1.msra.mxu0 0.0
    %1205 = vmatprep.subr.mxu0 0.0
    %1206 = vmatpush1.msra.mxu0 0.0
    %1207 = vmatprep.subr.mxu0 0.0
    %1208 = vmatpush1.msra.mxu0 0.0
    %1209 = vmatprep.subr.mxu0 0.0
    %1210 = vmatpush1.msra.mxu0 0.0
    %1211 = vmatprep.subr.mxu0 0.0
    %1212 = vmatpush1.msra.mxu0 0.0
    %1213 = vmatprep.subr.mxu0 0.0
    %1214 = vmatpush1.msra.mxu0 0.0
    %1215 = vmatprep.mubr.f32.mxu0 0.0
    %1216 = vmatmul.mubr.f32.gmra.mrb[0].mxu0 %v1149
    %v1217 = vpop.f32.mrb[0].mxu0
    %v1218 = vadd.f32 0.0, %v1217
    %v1219 = vpop.f32.mrb[0].mxu0
    %1220 = vdwg.mxu0
    %v1221 = vadd.f32 %v423, %v1218
    %v1222 = vxor.u32 %v1221, 2147483648
    %v1223 = vmul.f32 %v1222, 1.442695
    %v1224 = vpow.pop %v1223
    %v1225 = vadd.f32 %v1224, 1.0
    %v1226 = vrcp.pop %v1225
    %v1227 = vmul.f32 1.0, %v1226
    %v1228 = vmul.f32 %v1227, %v431
    %v1229 = vadd.f32 %v1228, %v432
    %v1230 = vmul.f32 %v1229, %v1139
    %1232 = vrot.lane.b32.xlu0 %v1229, 96
    %v1233 = vpop.permute.xlu0 %1232
    %v1235 = vmul.f32 %v1229, %v1233
    %1237 = vrot.lane.b32.xlu0 %v1235, 16
    %v1238 = vpop.permute.xlu0 %1237
    %v1240 = vadd.f32 %v1230, %v1238
    %v1241 = vtanh.pop %v1240
    %1243 = vrot.lane.b32.xlu0 %v1241, 32
    %v1244 = vpop.permute.xlu0 %1243
    %v1246 = vmul.f32 %v1229, %v1244
    %v1247 = vld [vmem:[#allocation2 + $0x80] sm:$0xff]
    %v1248 = vld [vmem:[#allocation2 + $0x88] sm:$0xff]
    %v1249 = vld [vmem:[#allocation2 + $0x90] sm:$0xff]
    %v1250 = vld [vmem:[#allocation2 + $0x98] sm:$0xff]
    %v1251 = vld [vmem:[#allocation2 + $0xa0] sm:$0xff]
    %v1252 = vld [vmem:[#allocation2 + $0xa8] sm:$0xff]
    %v1254 = vsel %vm207, %v278, 0
    %1256 = vmatprep.subr.mxu0 0.0
    %1257 = vmatpush1.msra.mxu0 %v1251
    %1258 = vmatprep.subr.mxu0 0.0
    %1259 = vmatpush1.msra.mxu0 %v1252
    %1260 = vmatprep.subr.mxu0 0.0
    %1261 = vmatpush1.msra.mxu0 0.0
    %1262 = vmatprep.subr.mxu0 0.0
    %1263 = vmatpush1.msra.mxu0 0.0
    %1264 = vmatprep.subr.mxu0 0.0
    %1265 = vmatpush1.msra.mxu0 0.0
    %1266 = vmatprep.subr.mxu0 0.0
    %1267 = vmatpush1.msra.mxu0 0.0
    %1268 = vmatprep.subr.mxu0 0.0
    %1269 = vmatpush1.msra.mxu0 0.0
    %1270 = vmatprep.subr.mxu0 0.0
    %1271 = vmatpush1.msra.mxu0 0.0
    %1272 = vmatprep.subr.mxu0 0.0
    %1273 = vmatpush1.msra.mxu0 0.0
    %1274 = vmatprep.subr.mxu0 0.0
    %1275 = vmatpush1.msra.mxu0 0.0
    %1276 = vmatprep.subr.mxu0 0.0
    %1277 = vmatpush1.msra.mxu0 0.0
    %1278 = vmatprep.subr.mxu0 0.0
    %1279 = vmatpush1.msra.mxu0 0.0
    %1280 = vmatprep.subr.mxu0 0.0
    %1281 = vmatpush1.msra.mxu0 0.0
    %1282 = vmatprep.subr.mxu0 0.0
    %1283 = vmatpush1.msra.mxu0 0.0
    %1284 = vmatprep.subr.mxu0 0.0
    %1285 = vmatpush1.msra.mxu0 0.0
    %1286 = vmatprep.subr.mxu0 0.0
    %1287 = vmatpush1.msra.mxu0 0.0
    %1288 = vmatprep.subr.mxu0 0.0
    %1289 = vmatpush1.msra.mxu0 0.0
    %1290 = vmatprep.subr.mxu0 0.0
    %1291 = vmatpush1.msra.mxu0 0.0
    %1292 = vmatprep.subr.mxu0 0.0
    %1293 = vmatpush1.msra.mxu0 0.0
    %1294 = vmatprep.subr.mxu0 0.0
    %1295 = vmatpush1.msra.mxu0 0.0
    %1296 = vmatprep.subr.mxu0 0.0
    %1297 = vmatpush1.msra.mxu0 0.0
    %1298 = vmatprep.subr.mxu0 0.0
    %1299 = vmatpush1.msra.mxu0 0.0
    %1300 = vmatprep.subr.mxu0 0.0
    %1301 = vmatpush1.msra.mxu0 0.0
    %1302 = vmatprep.subr.mxu0 0.0
    %1303 = vmatpush1.msra.mxu0 0.0
    %1304 = vmatprep.subr.mxu0 0.0
    %1305 = vmatpush1.msra.mxu0 0.0
    %1306 = vmatprep.subr.mxu0 0.0
    %1307 = vmatpush1.msra.mxu0 0.0
    %1308 = vmatprep.subr.mxu0 0.0
    %1309 = vmatpush1.msra.mxu0 0.0
    %1310 = vmatprep.subr.mxu0 0.0
    %1311 = vmatpush1.msra.mxu0 0.0
    %1312 = vmatprep.subr.mxu0 0.0
    %1313 = vmatpush1.msra.mxu0 0.0
    %1314 = vmatprep.subr.mxu0 0.0
    %1315 = vmatpush1.msra.mxu0 0.0
    %1316 = vmatprep.subr.mxu0 0.0
    %1317 = vmatpush1.msra.mxu0 0.0
    %1318 = vmatprep.subr.mxu0 0.0
    %1319 = vmatpush1.msra.mxu0 0.0
    %1320 = vmatprep.mubr.f32.mxu0 0.0
    %1321 = vmatmul.mubr.f32.gmra.mrb[0].mxu0 %v1254
    %v1322 = vpop.f32.mrb[0].mxu0
    %v1323 = vadd.f32 0.0, %v1322
    %v1324 = vpop.f32.mrb[0].mxu0
    %1325 = vdwg.mxu0
    %v1327 = vsel %vm47, %v203, 0
    %1329 = vmatprep.subr.mxu0 0.0
    %1330 = vmatpush1.msra.mxu0 %v1247
    %1331 = vmatprep.subr.mxu0 0.0
    %1332 = vmatpush1.msra.mxu0 %v1248
    %1333 = vmatprep.subr.mxu0 0.0
    %1334 = vmatpush1.msra.mxu0 %v1249
    %1335 = vmatprep.subr.mxu0 0.0
    %1336 = vmatpush1.msra.mxu0 %v1250
    %1337 = vmatprep.subr.mxu0 0.0
    %1338 = vmatpush1.msra.mxu0 0.0
    %1339 = vmatprep.subr.mxu0 0.0
    %1340 = vmatpush1.msra.mxu0 0.0
    %1341 = vmatprep.subr.mxu0 0.0
    %1342 = vmatpush1.msra.mxu0 0.0
    %1343 = vmatprep.subr.mxu0 0.0
    %1344 = vmatpush1.msra.mxu0 0.0
    %1345 = vmatprep.subr.mxu0 0.0
    %1346 = vmatpush1.msra.mxu0 0.0
    %1347 = vmatprep.subr.mxu0 0.0
    %1348 = vmatpush1.msra.mxu0 0.0
    %1349 = vmatprep.subr.mxu0 0.0
    %1350 = vmatpush1.msra.mxu0 0.0
    %1351 = vmatprep.subr.mxu0 0.0
    %1352 = vmatpush1.msra.mxu0 0.0
    %1353 = vmatprep.subr.mxu0 0.0
    %1354 = vmatpush1.msra.mxu0 0.0
    %1355 = vmatprep.subr.mxu0 0.0
    %1356 = vmatpush1.msra.mxu0 0.0
    %1357 = vmatprep.subr.mxu0 0.0
    %1358 = vmatpush1.msra.mxu0 0.0
    %1359 = vmatprep.subr.mxu0 0.0
    %1360 = vmatpush1.msra.mxu0 0.0
    %1361 = vmatprep.subr.mxu0 0.0
    %1362 = vmatpush1.msra.mxu0 0.0
    %1363 = vmatprep.subr.mxu0 0.0
    %1364 = vmatpush1.msra.mxu0 0.0
    %1365 = vmatprep.subr.mxu0 0.0
    %1366 = vmatpush1.msra.mxu0 0.0
    %1367 = vmatprep.subr.mxu0 0.0
    %1368 = vmatpush1.msra.mxu0 0.0
    %1369 = vmatprep.subr.mxu0 0.0
    %1370 = vmatpush1.msra.mxu0 0.0
    %1371 = vmatprep.subr.mxu0 0.0
    %1372 = vmatpush1.msra.mxu0 0.0
    %1373 = vmatprep.subr.mxu0 0.0
    %1374 = vmatpush1.msra.mxu0 0.0
    %1375 = vmatprep.subr.mxu0 0.0
    %1376 = vmatpush1.msra.mxu0 0.0
    %1377 = vmatprep.subr.mxu0 0.0
    %1378 = vmatpush1.msra.mxu0 0.0
    %1379 = vmatprep.subr.mxu0 0.0
    %1380 = vmatpush1.msra.mxu0 0.0
    %1381 = vmatprep.subr.mxu0 0.0
    %1382 = vmatpush1.msra.mxu0 0.0
    %1383 = vmatprep.subr.mxu0 0.0
    %1384 = vmatpush1.msra.mxu0 0.0
    %1385 = vmatprep.subr.mxu0 0.0
    %1386 = vmatpush1.msra.mxu0 0.0
    %1387 = vmatprep.subr.mxu0 0.0
    %1388 = vmatpush1.msra.mxu0 0.0
    %1389 = vmatprep.subr.mxu0 0.0
    %1390 = vmatpush1.msra.mxu0 0.0
    %1391 = vmatprep.subr.mxu0 0.0
    %1392 = vmatpush1.msra.mxu0 0.0
    %1393 = vmatprep.mubr.f32.mxu0 0.0
    %1394 = vmatmul.mubr.f32.gmra.mrb[0].mxu0 %v1327
    %v1395 = vpop.f32.mrb[0].mxu0
    %v1396 = vadd.f32 %v1323, %v1395
    %v1397 = vpop.f32.mrb[0].mxu0
    %1398 = vdwg.mxu0
    %v1399 = vld [vmem:[#allocation2 + $0xb0] sm:$0xff]
    %v1400 = vld [vmem:[#allocation2 + $0xb8] sm:$0xff]
    %1402 = vrot.lane.b32.xlu0 %v1246, 80
    %v1403 = vpop.permute.xlu0 %1402
    %v1404 = vsel %vm207, %v1403, 0
    %1406 = vmatprep.subr.mxu0 0.0
    %1407 = vmatpush1.msra.mxu0 %v1399
    %1408 = vmatprep.subr.mxu0 0.0
    %1409 = vmatpush1.msra.mxu0 %v1400
    %1410 = vmatprep.subr.mxu0 0.0
    %1411 = vmatpush1.msra.mxu0 0.0
    %1412 = vmatprep.subr.mxu0 0.0
    %1413 = vmatpush1.msra.mxu0 0.0
    %1414 = vmatprep.subr.mxu0 0.0
    %1415 = vmatpush1.msra.mxu0 0.0
    %1416 = vmatprep.subr.mxu0 0.0
    %1417 = vmatpush1.msra.mxu0 0.0
    %1418 = vmatprep.subr.mxu0 0.0
    %1419 = vmatpush1.msra.mxu0 0.0
    %1420 = vmatprep.subr.mxu0 0.0
    %1421 = vmatpush1.msra.mxu0 0.0
    %1422 = vmatprep.subr.mxu0 0.0
    %1423 = vmatpush1.msra.mxu0 0.0
    %1424 = vmatprep.subr.mxu0 0.0
    %1425 = vmatpush1.msra.mxu0 0.0
    %1426 = vmatprep.subr.mxu0 0.0
    %1427 = vmatpush1.msra.mxu0 0.0
    %1428 = vmatprep.subr.mxu0 0.0
    %1429 = vmatpush1.msra.mxu0 0.0
    %1430 = vmatprep.subr.mxu0 0.0
    %1431 = vmatpush1.msra.mxu0 0.0
    %1432 = vmatprep.subr.mxu0 0.0
    %1433 = vmatpush1.msra.mxu0 0.0
    %1434 = vmatprep.subr.mxu0 0.0
    %1435 = vmatpush1.msra.mxu0 0.0
    %1436 = vmatprep.subr.mxu0 0.0
    %1437 = vmatpush1.msra.mxu0 0.0
    %1438 = vmatprep.subr.mxu0 0.0
    %1439 = vmatpush1.msra.mxu0 0.0
    %1440 = vmatprep.subr.mxu0 0.0
    %1441 = vmatpush1.msra.mxu0 0.0
    %1442 = vmatprep.subr.mxu0 0.0
    %1443 = vmatpush1.msra.mxu0 0.0
    %1444 = vmatprep.subr.mxu0 0.0
    %1445 = vmatpush1.msra.mxu0 0.0
    %1446 = vmatprep.subr.mxu0 0.0
    %1447 = vmatpush1.msra.mxu0 0.0
    %1448 = vmatprep.subr.mxu0 0.0
    %1449 = vmatpush1.msra.mxu0 0.0
    %1450 = vmatprep.subr.mxu0 0.0
    %1451 = vmatpush1.msra.mxu0 0.0
    %1452 = vmatprep.subr.mxu0 0.0
    %1453 = vmatpush1.msra.mxu0 0.0
    %1454 = vmatprep.subr.mxu0 0.0
    %1455 = vmatpush1.msra.mxu0 0.0
    %1456 = vmatprep.subr.mxu0 0.0
    %1457 = vmatpush1.msra.mxu0 0.0
    %1458 = vmatprep.subr.mxu0 0.0
    %1459 = vmatpush1.msra.mxu0 0.0
    %1460 = vmatprep.subr.mxu0 0.0
    %1461 = vmatpush1.msra.mxu0 0.0
    %1462 = vmatprep.subr.mxu0 0.0
    %1463 = vmatpush1.msra.mxu0 0.0
    %1464 = vmatprep.subr.mxu0 0.0
    %1465 = vmatpush1.msra.mxu0 0.0
    %1466 = vmatprep.subr.mxu0 0.0
    %1467 = vmatpush1.msra.mxu0 0.0
    %1468 = vmatprep.subr.mxu0 0.0
    %1469 = vmatpush1.msra.mxu0 0.0
    %1470 = vmatprep.mubr.f32.mxu0 0.0
    %1471 = vmatmul.mubr.f32.gmra.mrb[0].mxu0 %v1404
    %v1472 = vpop.f32.mrb[0].mxu0
    %v1473 = vadd.f32 0.0, %v1472
    %v1474 = vpop.f32.mrb[0].mxu0
    %1475 = vdwg.mxu0
    %v1476 = vadd.f32 %v1396, %v1473
    %v1477 = vlaneseq
    %v1478 = vshrl.u32 %v1477, 7
    %v1479 = vsub.s32 3, %v1478
    %v1480 = vrot.slane %v37, %v1479
    %v1481 = vadd.f32 %v1476, %v1480
    %v1482 = vmax.f32 %v1481, 0.0
    %v1483 = vld [vmem:[#allocation2 + $0xc0] sm:$0xff]
    %v1484 = vld [vmem:[#allocation2 + $0xc8] sm:$0xff]
    %v1485 = vld [vmem:[#allocation2 + $0xd0] sm:$0xff]
    %v1486 = vld [vmem:[#allocation2 + $0xd8] sm:$0xff]
    %v1487 = vld [vmem:[#allocation2 + $0xe0] sm:$0xff]
    %v1488 = vld [vmem:[#allocation2 + $0xe8] sm:$0xff]
    %v1489 = vld [vmem:[#allocation2 + $0xf0] sm:$0xff]
    %v1490 = vld [vmem:[#allocation2 + $0xf8] sm:$0xff]
    %v1491 = vlaneseq
    %v1492 = vshrl.u32 %v1491, 7
    %v1493 = vsub.s32 4, %v1492
    %v1494 = vrot.slane %v37, %v1493
    %vm1495 = vcmask 523264
    %v1497 = vsel %vm1495, %v1482, 0
    %1499 = vmatprep.subr.mxu0 0.0
    %1500 = vmatpush1.msra.mxu0 %v1483
    %1501 = vmatprep.subr.mxu0 0.0
    %1502 = vmatpush1.msra.mxu0 %v1484
    %1503 = vmatprep.subr.mxu0 0.0
    %1504 = vmatpush1.msra.mxu0 %v1485
    %1505 = vmatprep.subr.mxu0 0.0
    %1506 = vmatpush1.msra.mxu0 %v1486
    %1507 = vmatprep.subr.mxu0 0.0
    %1508 = vmatpush1.msra.mxu0 %v1487
    %1509 = vmatprep.subr.mxu0 0.0
    %1510 = vmatpush1.msra.mxu0 %v1488
    %1511 = vmatprep.subr.mxu0 0.0
    %1512 = vmatpush1.msra.mxu0 %v1489
    %1513 = vmatprep.subr.mxu0 0.0
    %1514 = vmatpush1.msra.mxu0 %v1490
    %1515 = vmatprep.subr.mxu0 0.0
    %1516 = vmatpush1.msra.mxu0 0.0
    %1517 = vmatprep.subr.mxu0 0.0
    %1518 = vmatpush1.msra.mxu0 0.0
    %1519 = vmatprep.subr.mxu0 0.0
    %1520 = vmatpush1.msra.mxu0 0.0
    %1521 = vmatprep.subr.mxu0 0.0
    %1522 = vmatpush1.msra.mxu0 0.0
    %1523 = vmatprep.subr.mxu0 0.0
    %1524 = vmatpush1.msra.mxu0 0.0
    %1525 = vmatprep.subr.mxu0 0.0
    %1526 = vmatpush1.msra.mxu0 0.0
    %1527 = vmatprep.subr.mxu0 0.0
    %1528 = vmatpush1.msra.mxu0 0.0
    %1529 = vmatprep.subr.mxu0 0.0
    %1530 = vmatpush1.msra.mxu0 0.0
    %1531 = vmatprep.subr.mxu0 0.0
    %1532 = vmatpush1.msra.mxu0 0.0
    %1533 = vmatprep.subr.mxu0 0.0
    %1534 = vmatpush1.msra.mxu0 0.0
    %1535 = vmatprep.subr.mxu0 0.0
    %1536 = vmatpush1.msra.mxu0 0.0
    %1537 = vmatprep.subr.mxu0 0.0
    %1538 = vmatpush1.msra.mxu0 0.0
    %1539 = vmatprep.subr.mxu0 0.0
    %1540 = vmatpush1.msra.mxu0 0.0
    %1541 = vmatprep.subr.mxu0 0.0
    %1542 = vmatpush1.msra.mxu0 0.0
    %1543 = vmatprep.subr.mxu0 0.0
    %1544 = vmatpush1.msra.mxu0 0.0
    %1545 = vmatprep.subr.mxu0 0.0
    %1546 = vmatpush1.msra.mxu0 0.0
    %1547 = vmatprep.subr.mxu0 0.0
    %1548 = vmatpush1.msra.mxu0 0.0
    %1549 = vmatprep.subr.mxu0 0.0
    %1550 = vmatpush1.msra.mxu0 0.0
    %1551 = vmatprep.subr.mxu0 0.0
    %1552 = vmatpush1.msra.mxu0 0.0
    %1553 = vmatprep.subr.mxu0 0.0
    %1554 = vmatpush1.msra.mxu0 0.0
    %1555 = vmatprep.subr.mxu0 0.0
    %1556 = vmatpush1.msra.mxu0 0.0
    %1557 = vmatprep.subr.mxu0 0.0
    %1558 = vmatpush1.msra.mxu0 0.0
    %1559 = vmatprep.subr.mxu0 0.0
    %1560 = vmatpush1.msra.mxu0 0.0
    %1561 = vmatprep.subr.mxu0 0.0
    %1562 = vmatpush1.msra.mxu0 0.0
    %1563 = vmatprep.mubr.f32.mxu0 0.0
    %1564 = vmatmul.mubr.f32.gmra.mrb[0].mxu0 %v1497
    %v1565 = vpop.f32.mrb[0].mxu0
    %v1566 = vadd.f32 %v1494, %v1565
    %v1567 = vpop.f32.mrb[0].mxu0
    %1568 = vdwg.mxu0
    %vm1569 = vcmask 138240
    %1570 = vst.msk [vmem:[%s6] sm:$0xff] %vm1569, %v1566
    %1572 = vst.msk [vmem:[%s6 + $0x8] sm:$0xff] %vm207, %v1403
    %1574 = vrot.lane.b32.xlu0 %v1240, 112
    %v1575 = vpop.permute.xlu0 %1574
    %1577 = vst.msk [vmem:[%s6 + $0x10] sm:$0xff] %vm207, %v1575
    // Predicated region
    $region30: #{werewolf_forward.1} parent=1 // pred_check
      _
    $region31: #{werewolf_forward.1} parent=1 // pred_check_branch
      %1579 = sbr.rel (0) target = $region33
    $region32: #{werewolf_forward.1} parent=1 // pred_region
      _
    $region33: #{werewolf_forward.1} parent=1 // pred_fallthru
      _
    // Predicated region
    $region34: #{werewolf_forward.1} parent=1 // pred_check
      _
    $region35: #{werewolf_forward.1} parent=1 // pred_check_branch
      %1581 = sbr.rel (0) target = $region37
    $region36: #{werewolf_forward.1} parent=1 // pred_region
      _
    $region37: #{werewolf_forward.1} parent=1 // pred_fallthru
      _
    %1582 = vsyncpa [#allocation3], 1

</llo_original>
